<compile_context>
chip_gen: v6e
topology: v6e:2x2x1
jax: 0.10.0
libtpu: 0.0.40
codegen_flags: <defaults>
</compile_context>

<pallas_src>
import jax
import jax.numpy as jnp
from jax.experimental import pallas as pl
from jax.experimental.pallas import tpu as pltpu

EPS = 1e-5


def _group_norm(h, gamma, beta, group_mat, inv_cnt):
    """3-pass GroupNorm on a (Bt, N, C) block (per packed sample, per group over N x gs).

    gamma/beta: (1, C).  group_mat: (C, C) with [i, j] = 1 iff channels i, j share a group
    (block-diagonal per packed sample).  inv_cnt = 1 / (N * group_size).
    Statistics in f32; variance via E[h^2] - mean^2; affine folded into scale/shift.
    """
    f32 = jnp.float32
    s1 = jnp.sum(h, axis=1)                                                   # (Bt, C)
    s2 = jnp.sum(h * h, axis=1)                                               # (Bt, C)
    mean = jnp.dot(s1, group_mat, preferred_element_type=f32) * inv_cnt       # (Bt, C)
    ex2 = jnp.dot(s2, group_mat, preferred_element_type=f32) * inv_cnt
    var = ex2 - mean * mean
    scale = gamma * jax.lax.rsqrt(var + EPS)                                  # (Bt, C)
    shift = beta - mean * scale
    return h * scale[:, None, :] + shift[:, None, :]


def aggregate_kernel(p_ref, x_ref, rows_ref,
                     wqv_ref, wp1_ref, gmat_pos_ref, wp2_ref,
                     gmat_att_ref, wa1_ref, wa2_ref,
                     out_ref):
    f32 = jnp.float32
    Bt, N, cin_p = x_ref.shape            # cin_p = G * C_in
    CP = wa1_ref.shape[0]                 # CP = G * C_out (packed, lane-dense channel width)
    c6 = wp1_ref.shape[1]                 # 6 * G (packed positional-encoding channels)
    cdt = x_ref.dtype                     # matmul operand dtype (f32 or bf16)

    rows = rows_ref[...]                  # packed 1-row params, (8, 2*CP) f32
    b_fused = rows[0:1, :]
    g6, b6 = rows[1:2, :c6], rows[2:3, :c6]
    ga1g, ga1b = rows[3:4, :CP], rows[4:5, :CP]
    ga2g, ga2b = rows[5:6, :CP], rows[6:7, :CP]
    ba2 = rows[7:8, :CP]

    x2 = x_ref[...].reshape(Bt * N, cin_p)
    p2 = p_ref[...].reshape(Bt * N, p_ref.shape[2])           # positions kept f32

    # positional encodings (att | value branch per packed sample): GN(groups of 3) -> ReLU
    hp = jnp.dot(p2, wp1_ref[...], preferred_element_type=f32).reshape(Bt, N, c6)
    hp = _group_norm(hp, g6, b6, gmat_pos_ref[...], 1.0 / (N * 3))
    hp = jnp.maximum(hp, 0.0).reshape(Bt * N, c6).astype(cdt)

    # fused projections: [q + ab_a | v + ab_v] + (bq+bpa2 | bv+bpv2) -> (rows, 2*CP)
    # TODO(synk): a single [x2|hp] concat + stacked-weight dot would drop one (rows, 2*CP)
    # add at the cost of a lane-offset concat copy; kept as two dots for robustness.
    fused = (jnp.dot(x2, wqv_ref[...], preferred_element_type=f32)
             + jnp.dot(hp, wp2_ref[...], preferred_element_type=f32)
             + b_fused)

    a = fused[:, :CP].reshape(Bt, N, CP)                       # q + ab_a
    v = fused[:, CP:].astype(cdt)                              # v + ab_v (bf16 mode halves
                                                               #  its live VMEM footprint)

    # to_attn: GN -> ReLU -> conv(no bias) -> GN -> ReLU -> conv(+bias)   (groups of 16)
    inv_cnt = 1.0 / (N * 16)
    gmat = gmat_att_ref[...]
    a = _group_norm(a, ga1g, ga1b, gmat, inv_cnt)
    a = jnp.maximum(a, 0.0).reshape(Bt * N, CP).astype(cdt)
    a = jnp.dot(a, wa1_ref[...], preferred_element_type=f32).reshape(Bt, N, CP)
    a = _group_norm(a, ga2g, ga2b, gmat, inv_cnt)
    a = jnp.maximum(a, 0.0).reshape(Bt * N, CP).astype(cdt)
    a = (jnp.dot(a, wa2_ref[...], preferred_element_type=f32) + ba2).reshape(Bt, N, CP)

    # softmax over the point axis, folded into the final weighted reduction
    m = jnp.max(a, axis=1, keepdims=True)                      # (Bt, 1, CP)
    e = jnp.exp(a - m)
    den = jnp.sum(e, axis=1)                                   # (Bt, CP)
    num = jnp.sum(v.reshape(Bt, N, CP).astype(f32) * e, axis=1)
    out_ref[...] = (num * pl.reciprocal(den, approx=True)).astype(out_ref.dtype)


def prepare_params(P, compute_dtype=jnp.float32):
    """One-time fusion / lane packing of the PyTorch-layout params (do NOT run per forward).

    compute_dtype=jnp.bfloat16 is recommended on every TPU generation (v5e's MXU is
    bf16-native too): it only affects the matmul operands (x, hp, a and the large weights);
    GroupNorm statistics, softmax and all accumulation stay float32, and the point
    coordinates stay float32 regardless.
    """
    f32 = jnp.float32
    C, C_in = P["wq"].shape
    assert C % 16 == 0
    cdt = compute_dtype

    # lane-packing factor: G batch samples side by side on the 128-lane axis
    G = 128 // C if (C <= 128 and 128 % C == 0) else 1
    CP = G * C

    t = lambda w: jnp.transpose(jnp.asarray(w, f32), (1, 0))
    eye_g = jnp.eye(G, dtype=f32)
    bdiag = lambda w: jnp.kron(eye_g, jnp.asarray(w, f32))          # G-fold block diagonal
    tile_row = lambda v: jnp.tile(jnp.asarray(v, f32).reshape(1, -1), (1, G))

    # fused [q | v] projection: (G*C_in, 2*CP); q columns for all samples, then v columns
    w_qv = jnp.concatenate([bdiag(t(P["wq"])), bdiag(t(P["wv"]))], axis=1).astype(cdt)
    b_fused = jnp.concatenate([jnp.tile(P["bq"] + P["bpa2"], G),
                               jnp.tile(P["bv"] + P["bpv2"], G)]).reshape(1, -1).astype(f32)

    # positional branch: per-sample (3, 6) = [wpa1.T | wpv1.T]; GN -> 2 groups of 3 / sample
    w_p1 = bdiag(jnp.concatenate([t(P["wpa1"]), t(P["wpv1"])], axis=1))       # (3G, 6G) f32
    gamma6 = tile_row(jnp.concatenate([P["gpa_g"], P["gpv_g"]]))              # (1, 6G)
    beta6 = tile_row(jnp.concatenate([P["gpa_b"], P["gpv_b"]]))
    idx6 = jnp.arange(6)
    gmat_pos = bdiag((idx6[:, None] // 3 == idx6[None, :] // 3).astype(f32))  # (6G, 6G)

    zeros3C = jnp.zeros((3, C), f32)
    w_p2 = jnp.concatenate(
        [bdiag(jnp.concatenate([t(P["wpa2"]), zeros3C], axis=0)),   # -> attention columns
         bdiag(jnp.concatenate([zeros3C, t(P["wpv2"])], axis=0))],  # -> value columns
        axis=1).astype(cdt)                                                   # (6G, 2*CP)

    idx = jnp.arange(C)
    gmat_att = bdiag((idx[:, None] // 16 == idx[None, :] // 16).astype(f32))  # (CP, CP)
    w_a1 = bdiag(t(P["wa1"])).astype(cdt)                                     # (CP, CP)
    w_a2 = bdiag(t(P["wa2"])).astype(cdt)

    # pack all seven 1-row params into a single (8, 2*CP) operand (one VMEM tile / DMA)
    pad = lambda r: jnp.pad(r, ((0, 0), (0, 2 * CP - r.shape[1])))
    rows = jnp.concatenate([
        b_fused, pad(gamma6), pad(beta6),
        pad(tile_row(P["ga1_g"])), pad(tile_row(P["ga1_b"])),
        pad(tile_row(P["ga2_g"])), pad(tile_row(P["ga2_b"])),
        pad(tile_row(P["ba2"])),
    ], axis=0)                                                                # (8, 2*CP) f32

    weights = (rows, w_qv, w_p1, gmat_pos, w_p2, gmat_att, w_a1, w_a2)
    return dict(C=C, C_in=C_in, G=G, CP=CP, compute_dtype=cdt, weights=weights)


def _pick_block_rows(b_pack, n, target_rows=2048):
    """Packed rows per grid step: ~target_rows MXU rows/step (amortizes the ~0.35us step
    overhead), >=2 grid steps whenever the batch allows it (v7x megacore sharding), and a
    sublane-legal out block (multiple of 8, or the whole padded batch)."""
    # TODO(synk): for very large N the point axis should be tiled too (bt floors at 8 packed
    # rows, so bt*N intermediates could exceed the VMEM budget when N is huge).
    if b_pack <= 8:
        return b_pack, b_pack
    bt = max(8, (target_rows // max(n, 1)) // 8 * 8)
    bt = min(bt, max(8, (b_pack // 2) // 8 * 8))
    b_pad = ((b_pack + bt - 1) // bt) * bt
    return bt, b_pad


def _vmem_limit_bytes():
    # ~8-12 MiB working set at the default tile; raise the scoped limit with headroom,
    # sized per generation (v7x: 64 MiB per TensorCore vs 128 MiB on v5e/v6e).
    default = 48 * 2**20
    try:
        cap = int(pltpu.get_tpu_info().vmem_capacity_bytes)
        if cap >= 64 * 2**20:
            return int(min(96 * 2**20, cap * 3 // 4))
    except Exception:
        pass
    return default


def aggregate_layer(p, x_ncl, fused_params):
    """p: (B, N, 3), x_ncl: (B, C_in, N) (PyTorch NCL).  Returns (B, C_out) float32."""
    B, N, _ = p.shape
    C = fused_params["C"]
    C_in = fused_params["C_in"]
    G = fused_params["G"]
    CP = fused_params["CP"]
    cdt = fused_params["compute_dtype"]
    weights = fused_params["weights"]
    assert x_ncl.shape == (B, C_in, N)

    b_pack = -(-B // G)                         # packed rows holding real samples
    bt, b_pad = _pick_block_rows(b_pack, N)
    b_total = b_pad * G                         # padded sample count

    if b_total != B:
        padn = b_total - B
        p = jnp.pad(p, ((0, padn), (0, 0), (0, 0)))
        x_ncl = jnp.pad(x_ncl, ((0, padn), (0, 0), (0, 0)))

    # Lane-pack G samples per row (one XLA copy pass): x -> (b_pad, N, G*C_in),
    # p -> (b_pad, N, G*3).  Padded samples are zeros; their GN groups / softmax lanes are
    # fully independent of the real samples (block-diagonal packing) and sliced off below.
    # TODO(synk): fold this relayout of x into the kernel to save one HBM round trip over x
    # (needs a per-block in-kernel transpose; a plain dot_general can't express the packing).
    x = jnp.transpose(x_ncl.reshape(b_pad, G, C_in, N), (0, 3, 1, 2))
    x = x.reshape(b_pad, N, G * C_in).astype(cdt)
    p = jnp.transpose(p.reshape(b_pad, G, N, 3), (0, 2, 1, 3))
    p = p.reshape(b_pad, N, G * 3).astype(jnp.float32)          # positions stay f32

    def batched_spec(arr):
        nd = arr.ndim
        return pl.BlockSpec((bt,) + tuple(arr.shape[1:]),
                            lambda b, _nd=nd: (b,) + (0,) * (_nd - 1))

    def full_spec(arr):
        nd = arr.ndim
        return pl.BlockSpec(tuple(arr.shape), lambda b, _nd=nd: (0,) * _nd)

    in_specs = [batched_spec(p), batched_spec(x)] + [full_spec(w) for w in weights]

    out = pl.pallas_call(
        aggregate_kernel,
        out_shape=jax.ShapeDtypeStruct((b_pad, CP), jnp.float32),
        grid=(b_pad // bt,),
        in_specs=in_specs,
        out_specs=pl.BlockSpec((bt, CP), lambda b: (b, 0)),
        compiler_params=pltpu.CompilerParams(
            dimension_semantics=("parallel",),
            vmem_limit_bytes=_vmem_limit_bytes()),
    )(p, x, *weights)

    # unpack lanes -> samples, drop padding
    return out[:b_pack].reshape(b_pack * G, C)[:B]


# ----------------------- reference (plain JAX, PyTorch layout) -----------------------
def ref_forward(p_bn3, x_bcl, P, num_groups):
    pt = jnp.transpose(p_bn3, (0, 2, 1))                    # (B, 3, N)

    def conv1d(x, w, b=None):                               # x: (B,Cin,N), w: (Cout,Cin)
        y = jnp.einsum("oc,bcn->bon", w, x)
        if b is not None:
            y = y + b[None, :, None]
        return y

    def gn(x, g, gamma, beta, eps=EPS):                     # x: (B,C,N)
        B, C, N = x.shape
        xg = x.reshape(B, g, (C // g) * N)
        m = xg.mean(axis=-1, keepdims=True)
        var = ((xg - m) ** 2).mean(axis=-1, keepdims=True)
        xn = ((xg - m) / jnp.sqrt(var + eps)).reshape(B, C, N)
        return xn * gamma[None, :, None] + beta[None, :, None]

    q = conv1d(x_bcl, P["wq"], P["bq"])
    v = conv1d(x_bcl, P["wv"], P["bv"])
    h = jax.nn.relu(gn(conv1d(pt, P["wpv1"]), 1, P["gpv_g"], P["gpv_b"]))
    v = v + conv1d(h, P["wpv2"], P["bpv2"])
    h = jax.nn.relu(gn(conv1d(pt, P["wpa1"]), 1, P["gpa_g"], P["gpa_b"]))
    a = q + conv1d(h, P["wpa2"], P["bpa2"])
    a = jax.nn.relu(gn(a, num_groups, P["ga1_g"], P["ga1_b"]))
    a = conv1d(a, P["wa1"])
    a = jax.nn.relu(gn(a, num_groups, P["ga2_g"], P["ga2_b"]))
    a = conv1d(a, P["wa2"], P["ba2"])
    a = jax.nn.softmax(a, axis=-1)
    return jnp.sum(v * a, axis=-1)


def init_params(key, c_in, c_out):
    ks = jax.random.split(key, 21)
    w = lambda k, s: 0.1 * jax.random.normal(k, s, dtype=jnp.float32)
    return dict(
        wq=w(ks[0], (c_out, c_in)), bq=w(ks[1], (c_out,)),
        wv=w(ks[2], (c_out, c_in)), bv=w(ks[3], (c_out,)),
        wpv1=w(ks[4], (3, 3)),
        gpv_g=1.0 + w(ks[5], (3,)), gpv_b=w(ks[6], (3,)),
        wpv2=w(ks[7], (c_out, 3)), bpv2=w(ks[8], (c_out,)),
        wpa1=w(ks[9], (3, 3)),
        gpa_g=1.0 + w(ks[10], (3,)), gpa_b=w(ks[11], (3,)),
        wpa2=w(ks[12], (c_out, 3)), bpa2=w(ks[13], (c_out,)),
        ga1_g=1.0 + w(ks[14], (c_out,)), ga1_b=w(ks[15], (c_out,)),
        wa1=w(ks[16], (c_out, c_out)),
        ga2_g=1.0 + w(ks[17], (c_out,)), ga2_b=w(ks[18], (c_out,)),
        wa2=w(ks[19], (c_out, c_out)), ba2=w(ks[20], (c_out,)),
    )


if __name__ == "__main__":
    B, N, C_in, C_out = 2, 16, 8, 32          # C_out % 16 == 0 as the module asserts
    key = jax.random.PRNGKey(0)
    kp, kx, kw, kp2, kx2 = jax.random.split(key, 5)

    p = jax.random.normal(kp, (B, N, 3), dtype=jnp.float32)       # points, (B, N, 3)
    x = jax.random.normal(kx, (B, C_in, N), dtype=jnp.float32)    # features, PyTorch NCL
    params = init_params(kw, C_in, C_out)

    # f32 compute (exact-ish check against the plain-JAX reference)
    fused_f32 = prepare_params(params, compute_dtype=jnp.float32)
    y = jax.block_until_ready(aggregate_layer(p, x, fused_f32))
    y_ref = ref_forward(p, x, params, C_out // 16)
    assert y.shape == (B, C_out)
    assert jnp.allclose(y, y_ref, atol=2e-3, rtol=1e-2), float(jnp.max(jnp.abs(y - y_ref)))

    # larger batch: exercises zero padding, 4-sample lane packing and the >=2-step grid
    B2 = 40
    p_big = jax.random.normal(kp2, (B2, N, 3), dtype=jnp.float32)
    x_big = jax.random.normal(kx2, (B2, C_in, N), dtype=jnp.float32)
    y2 = jax.block_until_ready(aggregate_layer(p_big, x_big, fused_f32))
    y2_ref = ref_forward(p_big, x_big, params, C_out // 16)
    assert jnp.allclose(y2, y2_ref, atol=2e-3, rtol=1e-2), float(jnp.max(jnp.abs(y2 - y2_ref)))

    # bf16 matmul operands (recommended on all generations, v5e included); GN/softmax stay f32
    fused_bf16 = prepare_params(params, compute_dtype=jnp.bfloat16)
    y_bf = jax.block_until_ready(aggregate_layer(p_big, x_big, fused_bf16))
    assert jnp.allclose(y_bf, y2_ref, atol=5e-2, rtol=5e-2), float(jnp.max(jnp.abs(y_bf - y2_ref)))

    print("KERNEL_OK")
</pallas_src>

<mosaic_0001>
module attributes {stable_mosaic.version = 11 : i64} {
  func.func @aggregate_kernel(%arg0: i32, %arg1: memref<1x16x12xf32, #tpu.memory_space<vmem>>, %arg2: memref<1x16x32xf32, #tpu.memory_space<vmem>>, %arg3: memref<8x256xf32, #tpu.memory_space<vmem>>, %arg4: memref<32x256xf32, #tpu.memory_space<vmem>>, %arg5: memref<12x24xf32, #tpu.memory_space<vmem>>, %arg6: memref<24x24xf32, #tpu.memory_space<vmem>>, %arg7: memref<24x256xf32, #tpu.memory_space<vmem>>, %arg8: memref<128x128xf32, #tpu.memory_space<vmem>>, %arg9: memref<128x128xf32, #tpu.memory_space<vmem>>, %arg10: memref<128x128xf32, #tpu.memory_space<vmem>>, %arg11: memref<1x128xf32, #tpu.memory_space<vmem>>) attributes {dimension_semantics = [#tpu.dimension_semantics<parallel>], iteration_bounds = array<i64: 1>, scalar_prefetch = 0 : i64, scratch_operands = 0 : i64, tpu.core_type = #tpu.core_type<tc>, window_params = [{transform_indices = @transform_0, window_bounds = array<i64: 1, 16, 12>}, {transform_indices = @transform_1, window_bounds = array<i64: 1, 16, 32>}, {pipeline_mode = #tpu.pipeline_mode<synchronous>, transform_indices = @transform_2, window_bounds = array<i64: 8, 256>}, {pipeline_mode = #tpu.pipeline_mode<synchronous>, transform_indices = @transform_3, window_bounds = array<i64: 32, 256>}, {pipeline_mode = #tpu.pipeline_mode<synchronous>, transform_indices = @transform_4, window_bounds = array<i64: 12, 24>}, {pipeline_mode = #tpu.pipeline_mode<synchronous>, transform_indices = @transform_5, window_bounds = array<i64: 24, 24>}, {pipeline_mode = #tpu.pipeline_mode<synchronous>, transform_indices = @transform_6, window_bounds = array<i64: 24, 256>}, {pipeline_mode = #tpu.pipeline_mode<synchronous>, transform_indices = @transform_7, window_bounds = array<i64: 128, 128>}, {pipeline_mode = #tpu.pipeline_mode<synchronous>, transform_indices = @transform_8, window_bounds = array<i64: 128, 128>}, {pipeline_mode = #tpu.pipeline_mode<synchronous>, transform_indices = @transform_9, window_bounds = array<i64: 128, 128>}, {transform_indices = @transform_10, window_bounds = array<i64: 1, 128>}]} {
    %c0 = arith.constant 0 : index
    %c0_0 = arith.constant 0 : index
    %0 = vector.load %arg3[%c0, %c0_0] : memref<8x256xf32, #tpu.memory_space<vmem>>, vector<8x256xf32>
    %1 = vector.extract_strided_slice %0 {offsets = [0, 0], sizes = [1, 256], strides = [1, 1]} : vector<8x256xf32> to vector<1x256xf32>
    %2 = vector.extract_strided_slice %0 {offsets = [1, 0], sizes = [1, 24], strides = [1, 1]} : vector<8x256xf32> to vector<1x24xf32>
    %3 = vector.extract_strided_slice %0 {offsets = [2, 0], sizes = [1, 24], strides = [1, 1]} : vector<8x256xf32> to vector<1x24xf32>
    %4 = vector.extract_strided_slice %0 {offsets = [3, 0], sizes = [1, 128], strides = [1, 1]} : vector<8x256xf32> to vector<1x128xf32>
    %5 = vector.extract_strided_slice %0 {offsets = [4, 0], sizes = [1, 128], strides = [1, 1]} : vector<8x256xf32> to vector<1x128xf32>
    %6 = vector.extract_strided_slice %0 {offsets = [5, 0], sizes = [1, 128], strides = [1, 1]} : vector<8x256xf32> to vector<1x128xf32>
    %7 = vector.extract_strided_slice %0 {offsets = [6, 0], sizes = [1, 128], strides = [1, 1]} : vector<8x256xf32> to vector<1x128xf32>
    %8 = vector.extract_strided_slice %0 {offsets = [7, 0], sizes = [1, 128], strides = [1, 1]} : vector<8x256xf32> to vector<1x128xf32>
    %c0_1 = arith.constant 0 : index
    %c0_2 = arith.constant 0 : index
    %c0_3 = arith.constant 0 : index
    %9 = vector.load %arg2[%c0_1, %c0_2, %c0_3] : memref<1x16x32xf32, #tpu.memory_space<vmem>>, vector<1x16x32xf32>
    %10 = vector.shape_cast %9 : vector<1x16x32xf32> to vector<16x32xf32>
    %c0_4 = arith.constant 0 : index
    %c0_5 = arith.constant 0 : index
    %c0_6 = arith.constant 0 : index
    %11 = vector.load %arg1[%c0_4, %c0_5, %c0_6] : memref<1x16x12xf32, #tpu.memory_space<vmem>>, vector<1x16x12xf32>
    %12 = vector.shape_cast %11 : vector<1x16x12xf32> to vector<16x12xf32>
    %c0_7 = arith.constant 0 : index
    %c0_8 = arith.constant 0 : index
    %13 = vector.load %arg5[%c0_7, %c0_8] : memref<12x24xf32, #tpu.memory_space<vmem>>, vector<12x24xf32>
    %cst = arith.constant dense<0.000000e+00> : vector<16x24xf32>
    %14 = tpu.matmul %12, %13, %cst {dimension_numbers = #tpu.dot_dimension_numbers<[1], [0], [0], [1], [0, 0, 1, 1], [], []>} : vector<16x12xf32>, vector<12x24xf32>, vector<16x24xf32> -> vector<16x24xf32>
    %15 = vector.shape_cast %14 : vector<16x24xf32> to vector<1x16x24xf32>
    %c0_9 = arith.constant 0 : index
    %c0_10 = arith.constant 0 : index
    %16 = vector.load %arg6[%c0_9, %c0_10] : memref<24x24xf32, #tpu.memory_space<vmem>>, vector<24x24xf32>
    %cst_11 = arith.constant dense<0.000000e+00> : vector<1x24xf32>
    %17 = vector.multi_reduction <add>, %15, %cst_11 [1] : vector<1x16x24xf32> to vector<1x24xf32>
    %18 = arith.mulf %15, %15 : vector<1x16x24xf32>
    %cst_12 = arith.constant dense<0.000000e+00> : vector<1x24xf32>
    %19 = vector.multi_reduction <add>, %18, %cst_12 [1] : vector<1x16x24xf32> to vector<1x24xf32>
    %cst_13 = arith.constant dense<0.000000e+00> : vector<1x24xf32>
    %20 = tpu.matmul %17, %16, %cst_13 {dimension_numbers = #tpu.dot_dimension_numbers<[1], [0], [0], [1], [0, 0, 1, 1], [], []>} : vector<1x24xf32>, vector<24x24xf32>, vector<1x24xf32> -> vector<1x24xf32>
    %cst_14 = arith.constant 0.020833334 : f32
    %21 = vector.broadcast %cst_14 : f32 to vector<1x24xf32>
    %22 = arith.mulf %20, %21 : vector<1x24xf32>
    %cst_15 = arith.constant dense<0.000000e+00> : vector<1x24xf32>
    %23 = tpu.matmul %19, %16, %cst_15 {dimension_numbers = #tpu.dot_dimension_numbers<[1], [0], [0], [1], [0, 0, 1, 1], [], []>} : vector<1x24xf32>, vector<24x24xf32>, vector<1x24xf32> -> vector<1x24xf32>
    %cst_16 = arith.constant 0.020833334 : f32
    %24 = vector.broadcast %cst_16 : f32 to vector<1x24xf32>
    %25 = arith.mulf %23, %24 : vector<1x24xf32>
    %26 = arith.mulf %22, %22 : vector<1x24xf32>
    %27 = arith.subf %25, %26 : vector<1x24xf32>
    %cst_17 = arith.constant 9.99999974E-6 : f32
    %28 = vector.broadcast %cst_17 : f32 to vector<1x24xf32>
    %29 = arith.addf %27, %28 : vector<1x24xf32>
    %30 = math.rsqrt %29 : vector<1x24xf32>
    %31 = arith.mulf %2, %30 : vector<1x24xf32>
    %32 = arith.mulf %22, %31 : vector<1x24xf32>
    %33 = arith.subf %3, %32 : vector<1x24xf32>
    %34 = vector.shape_cast %31 : vector<1x24xf32> to vector<1x1x24xf32>
    %35 = vector.broadcast %34 : vector<1x1x24xf32> to vector<1x16x24xf32>
    %36 = arith.mulf %15, %35 : vector<1x16x24xf32>
    %37 = vector.shape_cast %33 : vector<1x24xf32> to vector<1x1x24xf32>
    %38 = vector.broadcast %37 : vector<1x1x24xf32> to vector<1x16x24xf32>
    %39 = arith.addf %36, %38 : vector<1x16x24xf32>
    %cst_18 = arith.constant 0.000000e+00 : f32
    %40 = vector.broadcast %cst_18 : f32 to vector<1x16x24xf32>
    %41 = arith.maximumf %39, %40 : vector<1x16x24xf32>
    %42 = vector.shape_cast %41 : vector<1x16x24xf32> to vector<16x24xf32>
    %c0_19 = arith.constant 0 : index
    %c0_20 = arith.constant 0 : index
    %43 = vector.load %arg4[%c0_19, %c0_20] : memref<32x256xf32, #tpu.memory_space<vmem>>, vector<32x256xf32>
    %cst_21 = arith.constant dense<0.000000e+00> : vector<16x256xf32>
    %44 = tpu.matmul %10, %43, %cst_21 {dimension_numbers = #tpu.dot_dimension_numbers<[1], [0], [0], [1], [0, 0, 1, 1], [], []>} : vector<16x32xf32>, vector<32x256xf32>, vector<16x256xf32> -> vector<16x256xf32>
    %c0_22 = arith.constant 0 : index
    %c0_23 = arith.constant 0 : index
    %45 = vector.load %arg7[%c0_22, %c0_23] : memref<24x256xf32, #tpu.memory_space<vmem>>, vector<24x256xf32>
    %cst_24 = arith.constant dense<0.000000e+00> : vector<16x256xf32>
    %46 = tpu.matmul %42, %45, %cst_24 {dimension_numbers = #tpu.dot_dimension_numbers<[1], [0], [0], [1], [0, 0, 1, 1], [], []>} : vector<16x24xf32>, vector<24x256xf32>, vector<16x256xf32> -> vector<16x256xf32>
    %47 = arith.addf %44, %46 : vector<16x256xf32>
    %48 = vector.broadcast %1 : vector<1x256xf32> to vector<16x256xf32>
    %49 = arith.addf %47, %48 : vector<16x256xf32>
    %50 = vector.extract_strided_slice %49 {offsets = [0, 0], sizes = [16, 128], strides = [1, 1]} : vector<16x256xf32> to vector<16x128xf32>
    %51 = vector.shape_cast %50 : vector<16x128xf32> to vector<1x16x128xf32>
    %52 = vector.extract_strided_slice %49 {offsets = [0, 128], sizes = [16, 128], strides = [1, 1]} : vector<16x256xf32> to vector<16x128xf32>
    %c0_25 = arith.constant 0 : index
    %c0_26 = arith.constant 0 : index
    %53 = vector.load %arg8[%c0_25, %c0_26] : memref<128x128xf32, #tpu.memory_space<vmem>>, vector<128x128xf32>
    %cst_27 = arith.constant dense<0.000000e+00> : vector<1x128xf32>
    %54 = vector.multi_reduction <add>, %51, %cst_27 [1] : vector<1x16x128xf32> to vector<1x128xf32>
    %55 = arith.mulf %51, %51 : vector<1x16x128xf32>
    %cst_28 = arith.constant dense<0.000000e+00> : vector<1x128xf32>
    %56 = vector.multi_reduction <add>, %55, %cst_28 [1] : vector<1x16x128xf32> to vector<1x128xf32>
    %cst_29 = arith.constant dense<0.000000e+00> : vector<1x128xf32>
    %57 = tpu.matmul %54, %53, %cst_29 {dimension_numbers = #tpu.dot_dimension_numbers<[1], [0], [0], [1], [0, 0, 1, 1], [], []>} : vector<1x128xf32>, vector<128x128xf32>, vector<1x128xf32> -> vector<1x128xf32>
    %cst_30 = arith.constant 3.906250e-03 : f32
    %58 = vector.broadcast %cst_30 : f32 to vector<1x128xf32>
    %59 = arith.mulf %57, %58 : vector<1x128xf32>
    %cst_31 = arith.constant dense<0.000000e+00> : vector<1x128xf32>
    %60 = tpu.matmul %56, %53, %cst_31 {dimension_numbers = #tpu.dot_dimension_numbers<[1], [0], [0], [1], [0, 0, 1, 1], [], []>} : vector<1x128xf32>, vector<128x128xf32>, vector<1x128xf32> -> vector<1x128xf32>
    %cst_32 = arith.constant 3.906250e-03 : f32
    %61 = vector.broadcast %cst_32 : f32 to vector<1x128xf32>
    %62 = arith.mulf %60, %61 : vector<1x128xf32>
    %63 = arith.mulf %59, %59 : vector<1x128xf32>
    %64 = arith.subf %62, %63 : vector<1x128xf32>
    %cst_33 = arith.constant 9.99999974E-6 : f32
    %65 = vector.broadcast %cst_33 : f32 to vector<1x128xf32>
    %66 = arith.addf %64, %65 : vector<1x128xf32>
    %67 = math.rsqrt %66 : vector<1x128xf32>
    %68 = arith.mulf %4, %67 : vector<1x128xf32>
    %69 = arith.mulf %59, %68 : vector<1x128xf32>
    %70 = arith.subf %5, %69 : vector<1x128xf32>
    %71 = vector.shape_cast %68 : vector<1x128xf32> to vector<1x1x128xf32>
    %72 = vector.broadcast %71 : vector<1x1x128xf32> to vector<1x16x128xf32>
    %73 = arith.mulf %51, %72 : vector<1x16x128xf32>
    %74 = vector.shape_cast %70 : vector<1x128xf32> to vector<1x1x128xf32>
    %75 = vector.broadcast %74 : vector<1x1x128xf32> to vector<1x16x128xf32>
    %76 = arith.addf %73, %75 : vector<1x16x128xf32>
    %cst_34 = arith.constant 0.000000e+00 : f32
    %77 = vector.broadcast %cst_34 : f32 to vector<1x16x128xf32>
    %78 = arith.maximumf %76, %77 : vector<1x16x128xf32>
    %79 = vector.shape_cast %78 : vector<1x16x128xf32> to vector<16x128xf32>
    %c0_35 = arith.constant 0 : index
    %c0_36 = arith.constant 0 : index
    %80 = vector.load %arg9[%c0_35, %c0_36] : memref<128x128xf32, #tpu.memory_space<vmem>>, vector<128x128xf32>
    %cst_37 = arith.constant dense<0.000000e+00> : vector<16x128xf32>
    %81 = tpu.matmul %79, %80, %cst_37 {dimension_numbers = #tpu.dot_dimension_numbers<[1], [0], [0], [1], [0, 0, 1, 1], [], []>} : vector<16x128xf32>, vector<128x128xf32>, vector<16x128xf32> -> vector<16x128xf32>
    %82 = vector.shape_cast %81 : vector<16x128xf32> to vector<1x16x128xf32>
    %cst_38 = arith.constant dense<0.000000e+00> : vector<1x128xf32>
    %83 = vector.multi_reduction <add>, %82, %cst_38 [1] : vector<1x16x128xf32> to vector<1x128xf32>
    %84 = arith.mulf %82, %82 : vector<1x16x128xf32>
    %cst_39 = arith.constant dense<0.000000e+00> : vector<1x128xf32>
    %85 = vector.multi_reduction <add>, %84, %cst_39 [1] : vector<1x16x128xf32> to vector<1x128xf32>
    %cst_40 = arith.constant dense<0.000000e+00> : vector<1x128xf32>
    %86 = tpu.matmul %83, %53, %cst_40 {dimension_numbers = #tpu.dot_dimension_numbers<[1], [0], [0], [1], [0, 0, 1, 1], [], []>} : vector<1x128xf32>, vector<128x128xf32>, vector<1x128xf32> -> vector<1x128xf32>
    %cst_41 = arith.constant 3.906250e-03 : f32
    %87 = vector.broadcast %cst_41 : f32 to vector<1x128xf32>
    %88 = arith.mulf %86, %87 : vector<1x128xf32>
    %cst_42 = arith.constant dense<0.000000e+00> : vector<1x128xf32>
    %89 = tpu.matmul %85, %53, %cst_42 {dimension_numbers = #tpu.dot_dimension_numbers<[1], [0], [0], [1], [0, 0, 1, 1], [], []>} : vector<1x128xf32>, vector<128x128xf32>, vector<1x128xf32> -> vector<1x128xf32>
    %cst_43 = arith.constant 3.906250e-03 : f32
    %90 = vector.broadcast %cst_43 : f32 to vector<1x128xf32>
    %91 = arith.mulf %89, %90 : vector<1x128xf32>
    %92 = arith.mulf %88, %88 : vector<1x128xf32>
    %93 = arith.subf %91, %92 : vector<1x128xf32>
    %cst_44 = arith.constant 9.99999974E-6 : f32
    %94 = vector.broadcast %cst_44 : f32 to vector<1x128xf32>
    %95 = arith.addf %93, %94 : vector<1x128xf32>
    %96 = math.rsqrt %95 : vector<1x128xf32>
    %97 = arith.mulf %6, %96 : vector<1x128xf32>
    %98 = arith.mulf %88, %97 : vector<1x128xf32>
    %99 = arith.subf %7, %98 : vector<1x128xf32>
    %100 = vector.shape_cast %97 : vector<1x128xf32> to vector<1x1x128xf32>
    %101 = vector.broadcast %100 : vector<1x1x128xf32> to vector<1x16x128xf32>
    %102 = arith.mulf %82, %101 : vector<1x16x128xf32>
    %103 = vector.shape_cast %99 : vector<1x128xf32> to vector<1x1x128xf32>
    %104 = vector.broadcast %103 : vector<1x1x128xf32> to vector<1x16x128xf32>
    %105 = arith.addf %102, %104 : vector<1x16x128xf32>
    %cst_45 = arith.constant 0.000000e+00 : f32
    %106 = vector.broadcast %cst_45 : f32 to vector<1x16x128xf32>
    %107 = arith.maximumf %105, %106 : vector<1x16x128xf32>
    %108 = vector.shape_cast %107 : vector<1x16x128xf32> to vector<16x128xf32>
    %c0_46 = arith.constant 0 : index
    %c0_47 = arith.constant 0 : index
    %109 = vector.load %arg10[%c0_46, %c0_47] : memref<128x128xf32, #tpu.memory_space<vmem>>, vector<128x128xf32>
    %cst_48 = arith.constant dense<0.000000e+00> : vector<16x128xf32>
    %110 = tpu.matmul %108, %109, %cst_48 {dimension_numbers = #tpu.dot_dimension_numbers<[1], [0], [0], [1], [0, 0, 1, 1], [], []>} : vector<16x128xf32>, vector<128x128xf32>, vector<16x128xf32> -> vector<16x128xf32>
    %111 = vector.broadcast %8 : vector<1x128xf32> to vector<16x128xf32>
    %112 = arith.addf %110, %111 : vector<16x128xf32>
    %113 = vector.shape_cast %112 : vector<16x128xf32> to vector<1x16x128xf32>
    %cst_49 = arith.constant dense<0xFF800000> : vector<1x128xf32>
    %114 = vector.multi_reduction <maximumf>, %113, %cst_49 [1] : vector<1x16x128xf32> to vector<1x128xf32>
    %115 = vector.shape_cast %114 : vector<1x128xf32> to vector<1x1x128xf32>
    %116 = vector.broadcast %115 : vector<1x1x128xf32> to vector<1x16x128xf32>
    %117 = arith.subf %113, %116 : vector<1x16x128xf32>
    %118 = math.exp %117 : vector<1x16x128xf32>
    %cst_50 = arith.constant dense<0.000000e+00> : vector<1x128xf32>
    %119 = vector.multi_reduction <add>, %118, %cst_50 [1] : vector<1x16x128xf32> to vector<1x128xf32>
    %120 = vector.shape_cast %52 : vector<16x128xf32> to vector<1x16x128xf32>
    %121 = arith.mulf %120, %118 : vector<1x16x128xf32>
    %cst_51 = arith.constant dense<0.000000e+00> : vector<1x128xf32>
    %122 = vector.multi_reduction <add>, %121, %cst_51 [1] : vector<1x16x128xf32> to vector<1x128xf32>
    %123 = tpu.reciprocal %119 {approx = true} : vector<1x128xf32> -> vector<1x128xf32>
    %124 = arith.mulf %122, %123 : vector<1x128xf32>
    %c0_52 = arith.constant 0 : index
    %c0_53 = arith.constant 0 : index
    %125 = vector.load %arg11[%c0_52, %c0_53] : memref<1x128xf32, #tpu.memory_space<vmem>>, vector<1x128xf32>
    tpu.vector_store %arg11[%c0_52, %c0_53], %124 {strides = array<i32>} : memref<1x128xf32, #tpu.memory_space<vmem>>, vector<1x128xf32>,
    return
  }
  func.func @transform_0(%arg0: i32) -> (i32, i32, i32) {
    %c0_i32 = arith.constant 0 : i32
    %c0_i32_0 = arith.constant 0 : i32
    %c0_i32_1 = arith.constant 0 : i32
    return %arg0, %c0_i32, %c0_i32_0 : i32, i32, i32
  }
  func.func @transform_1(%arg0: i32) -> (i32, i32, i32) {
    %c0_i32 = arith.constant 0 : i32
    %c0_i32_0 = arith.constant 0 : i32
    %c0_i32_1 = arith.constant 0 : i32
    return %arg0, %c0_i32, %c0_i32_0 : i32, i32, i32
  }
  func.func @transform_2(%arg0: i32) -> (i32, i32) {
    %c0_i32 = arith.constant 0 : i32
    %c0_i32_0 = arith.constant 0 : i32
    %c0_i32_1 = arith.constant 0 : i32
    return %c0_i32, %c0_i32_0 : i32, i32
  }
  func.func @transform_3(%arg0: i32) -> (i32, i32) {
    %c0_i32 = arith.constant 0 : i32
    %c0_i32_0 = arith.constant 0 : i32
    %c0_i32_1 = arith.constant 0 : i32
    return %c0_i32, %c0_i32_0 : i32, i32
  }
  func.func @transform_4(%arg0: i32) -> (i32, i32) {
    %c0_i32 = arith.constant 0 : i32
    %c0_i32_0 = arith.constant 0 : i32
    %c0_i32_1 = arith.constant 0 : i32
    return %c0_i32, %c0_i32_0 : i32, i32
  }
  func.func @transform_5(%arg0: i32) -> (i32, i32) {
    %c0_i32 = arith.constant 0 : i32
    %c0_i32_0 = arith.constant 0 : i32
    %c0_i32_1 = arith.constant 0 : i32
    return %c0_i32, %c0_i32_0 : i32, i32
  }
  func.func @transform_6(%arg0: i32) -> (i32, i32) {
    %c0_i32 = arith.constant 0 : i32
    %c0_i32_0 = arith.constant 0 : i32
    %c0_i32_1 = arith.constant 0 : i32
    return %c0_i32, %c0_i32_0 : i32, i32
  }
  func.func @transform_7(%arg0: i32) -> (i32, i32) {
    %c0_i32 = arith.constant 0 : i32
    %c0_i32_0 = arith.constant 0 : i32
    %c0_i32_1 = arith.constant 0 : i32
    return %c0_i32, %c0_i32_0 : i32, i32
  }
  func.func @transform_8(%arg0: i32) -> (i32, i32) {
    %c0_i32 = arith.constant 0 : i32
    %c0_i32_0 = arith.constant 0 : i32
    %c0_i32_1 = arith.constant 0 : i32
    return %c0_i32, %c0_i32_0 : i32, i32
  }
  func.func @transform_9(%arg0: i32) -> (i32, i32) {
    %c0_i32 = arith.constant 0 : i32
    %c0_i32_0 = arith.constant 0 : i32
    %c0_i32_1 = arith.constant 0 : i32
    return %c0_i32, %c0_i32_0 : i32, i32
  }
  func.func @transform_10(%arg0: i32) -> (i32, i32) {
    %c0_i32 = arith.constant 0 : i32
    %c0_i32_0 = arith.constant 0 : i32
    return %arg0, %c0_i32 : i32, i32
  }
}

</mosaic_0001>

<llo_original>
// kernel: tpu_custom_call.1
$region0: #{tpu_custom_call.1}
  #allocation0 [shape = 'u32[]', space=smem, size = 0x4, offset = 0x4, fixed_abs, tag = 'smem constant byte address 0x4 - core index']
  #allocation1 [shape = 'u32[144,128]{1,0:T(1,128)}', space=vmem, size = 0x12000, scoped, tag = 'internal scratch']
  %s0 = inlined_call_operand.vmem [shape: f32[1,16,12], index: 0, kind: input, shape index: {}]
  %s1 = inlined_call_operand.hbm [shape: f32[1,16,32], index: 1, kind: input, shape index: {}]
  %s2 = inlined_call_operand.hbm [shape: f32[8,256], index: 2, kind: input, shape index: {}]
  %s3 = inlined_call_operand.hbm [shape: f32[32,256], index: 3, kind: input, shape index: {}]
  %s4 = inlined_call_operand.hbm [shape: f32[12,24], index: 4, kind: input, shape index: {}]
  %s5 = inlined_call_operand.vmem [shape: f32[24,24], index: 5, kind: input, shape index: {}]
  %s6 = inlined_call_operand.hbm [shape: f32[24,256], index: 6, kind: input, shape index: {}]
  %s7 = inlined_call_operand.hbm [shape: f32[128,128], index: 7, kind: input, shape index: {}]
  %s8 = inlined_call_operand.hbm [shape: f32[128,128], index: 8, kind: input, shape index: {}]
  %s9 = inlined_call_operand.hbm [shape: f32[128,128], index: 9, kind: input, shape index: {}]
  %s10 = inlined_call_operand.hbm [shape: f32[1,128], index: 10, kind: output, shape index: {}]
  %s11 = sld [smem:[#allocation0]]
  $region82: #{tpu_custom_call.1} parent=0
    _
  %s13 = ssub.s32 1, %s11
  %s14 = scalar_select 0, %s13, %s11
  $region1: #{tpu_custom_call.1} parent=0
    #allocation2 [shape = 'u8[8192]{0}', space=vmem, size = 0x2000, scoped, tag = 'input window, operand 1, single buffered']
    #allocation3 [shape = 's32[1]{0}', space=sflag, size = 0x4, scoped, tag = 'scoped memory for tpu_custom_call.1']
    #allocation4 [shape = 's32[1]{0}', space=sflag, size = 0x4, scoped, tag = 'scoped memory for tpu_custom_call.1']
    #allocation5 [shape = 'u8[8192]{0}', space=vmem, size = 0x2000, scoped, tag = 'input window, operand 2, single buffered']
    #allocation6 [shape = 's32[1]{0}', space=sflag, size = 0x4, scoped, tag = 'scoped memory for tpu_custom_call.1']
    #allocation7 [shape = 'u8[32768]{0}', space=vmem, size = 0x8000, scoped, tag = 'input window, operand 3, single buffered']
    #allocation8 [shape = 'u8[8192]{0}', space=vmem, size = 0x2000, scoped, tag = 'input window, operand 4, single buffered']
    #allocation9 [shape = 's32[1]{0}', space=sflag, size = 0x4, scoped, tag = 'scoped memory for tpu_custom_call.1']
    #allocation10 [shape = 'u8[24576]{0}', space=vmem, size = 0x6000, scoped, tag = 'input window, operand 6, single buffered']
    #allocation11 [shape = 'u8[65536]{0}', space=vmem, size = 0x10000, scoped, tag = 'input window, operand 7, single buffered']
    #allocation12 [shape = 's32[1]{0}', space=sflag, size = 0x4, scoped, tag = 'scoped memory for tpu_custom_call.1']
    #allocation13 [shape = 'u8[65536]{0}', space=vmem, size = 0x10000, scoped, tag = 'input window, operand 8, single buffered']
    #allocation14 [shape = 'u8[65536]{0}', space=vmem, size = 0x10000, scoped, tag = 'input window, operand 9, single buffered']
    #allocation15 [shape = 's32[1]{0}', space=sflag, size = 0x4, scoped, tag = 'scoped memory for tpu_custom_call.1']
    #allocation16 [shape = 'u8[512]{0}', space=vmem, size = 0x400, scoped, tag = 'output window, operand 0, single buffered']
    %15 = vsyncpa [#allocation3], 0
    %16 = vsyncpa [#allocation6], 0
    %17 = vsyncpa [#allocation9], 0
    %18 = vsyncpa [#allocation12], 0
    %19 = vsyncpa [#allocation15], 0
    %20 = vsyncpa [#allocation4], 0
    // Predicated region
    $region2: #{tpu_custom_call.1} parent=1 // pred_check
      _
    $region3: #{tpu_custom_call.1} parent=1 // pred_check_branch
      %22 = sbr.rel (0) target = $region5
    $region4: #{tpu_custom_call.1} parent=1 // pred_region
      _
    $region5: #{tpu_custom_call.1} parent=1 // pred_fallthru
      _
    // Predicated region
    $region6: #{tpu_custom_call.1} parent=1 // pred_check
      _
    $region7: #{tpu_custom_call.1} parent=1 // pred_check_branch
      %24 = sbr.rel (0) target = $region9
    $region8: #{tpu_custom_call.1} parent=1 // pred_region
      %s26 = ssub.s32 256, 256
      %27 = vsyncadd [#allocation3], %s26
      %s28 = sshll.u32 [#allocation2], 4
      %s29 = int_to_ptr.vmem [resolvable:$true] %s28
      %34 = dma.hbm_to_vmem [thread:$0]  %s1, 256, %s29, [#allocation3], 128, 128, 8
    $region9: #{tpu_custom_call.1} parent=1 // pred_fallthru
      _
    // Predicated region
    $region10: #{tpu_custom_call.1} parent=1 // pred_check
      _
    $region11: #{tpu_custom_call.1} parent=1 // pred_check_branch
      %36 = sbr.rel (0) target = $region13
    $region12: #{tpu_custom_call.1} parent=1 // pred_region
      %s38 = ssub.s32 256, 256
      %39 = vsyncadd [#allocation6], %s38
      %s41 = sshll.u32 [#allocation5], 4
      %s42 = int_to_ptr.vmem [resolvable:$true] %s41
      %44 = dma.hbm_to_vmem [thread:$0]  %s2, 256, %s42, [#allocation6]
    $region13: #{tpu_custom_call.1} parent=1 // pred_fallthru
      _
    // Predicated region
    $region14: #{tpu_custom_call.1} parent=1 // pred_check
      _
    $region15: #{tpu_custom_call.1} parent=1 // pred_check_branch
      %46 = sbr.rel (0) target = $region17
    $region16: #{tpu_custom_call.1} parent=1 // pred_region
      %s48 = ssub.s32 1024, 1024
      %49 = vsyncadd [#allocation6], %s48
      %s50 = sshll.u32 [#allocation7], 4
      %s51 = int_to_ptr.vmem [resolvable:$true] %s50
      %56 = dma.hbm_to_vmem [thread:$0]  %s3, 1024, %s51, [#allocation6], 256, 256, 16
    $region17: #{tpu_custom_call.1} parent=1 // pred_fallthru
      _
    // Predicated region
    $region18: #{tpu_custom_call.1} parent=1 // pred_check
      _
    $region19: #{tpu_custom_call.1} parent=1 // pred_check_branch
      %58 = sbr.rel (0) target = $region21
    $region20: #{tpu_custom_call.1} parent=1 // pred_region
      %s60 = ssub.s32 256, 256
      %61 = vsyncadd [#allocation9], %s60
      %s62 = sshll.u32 [#allocation8], 4
      %s63 = int_to_ptr.vmem [resolvable:$true] %s62
      %68 = dma.hbm_to_vmem [thread:$0]  %s4, 256, %s63, [#allocation9], 128, 128, 8
    $region21: #{tpu_custom_call.1} parent=1 // pred_fallthru
      _
    // Predicated region
    $region22: #{tpu_custom_call.1} parent=1 // pred_check
      _
    $region23: #{tpu_custom_call.1} parent=1 // pred_check_branch
      %70 = sbr.rel (0) target = $region25
    $region24: #{tpu_custom_call.1} parent=1 // pred_region
      _
    $region25: #{tpu_custom_call.1} parent=1 // pred_fallthru
      _
    // Predicated region
    $region26: #{tpu_custom_call.1} parent=1 // pred_check
      _
    $region27: #{tpu_custom_call.1} parent=1 // pred_check_branch
      %72 = sbr.rel (0) target = $region29
    $region28: #{tpu_custom_call.1} parent=1 // pred_region
      %s74 = ssub.s32 768, 768
      %75 = vsyncadd [#allocation9], %s74
      %s76 = sshll.u32 [#allocation10], 4
      %s77 = int_to_ptr.vmem [resolvable:$true] %s76
      %82 = dma.hbm_to_vmem [thread:$0]  %s6, 768, %s77, [#allocation9], 256, 256, 16
    $region29: #{tpu_custom_call.1} parent=1 // pred_fallthru
      _
    // Predicated region
    $region30: #{tpu_custom_call.1} parent=1 // pred_check
      _
    $region31: #{tpu_custom_call.1} parent=1 // pred_check_branch
      %84 = sbr.rel (0) target = $region33
    $region32: #{tpu_custom_call.1} parent=1 // pred_region
      %s86 = ssub.s32 2048, 2048
      %87 = vsyncadd [#allocation12], %s86
      %s88 = sshll.u32 [#allocation11], 4
      %s89 = int_to_ptr.vmem [resolvable:$true] %s88
      %94 = dma.hbm_to_vmem [thread:$0]  %s7, 2048, %s89, [#allocation12], 128, 128, 8
    $region33: #{tpu_custom_call.1} parent=1 // pred_fallthru
      _
    // Predicated region
    $region34: #{tpu_custom_call.1} parent=1 // pred_check
      _
    $region35: #{tpu_custom_call.1} parent=1 // pred_check_branch
      %96 = sbr.rel (0) target = $region37
    $region36: #{tpu_custom_call.1} parent=1 // pred_region
      %s98 = ssub.s32 2048, 2048
      %99 = vsyncadd [#allocation12], %s98
      %s100 = sshll.u32 [#allocation13], 4
      %s101 = int_to_ptr.vmem [resolvable:$true] %s100
      %106 = dma.hbm_to_vmem [thread:$0]  %s8, 2048, %s101, [#allocation12], 128, 128, 8
    $region37: #{tpu_custom_call.1} parent=1 // pred_fallthru
      _
    // Predicated region
    $region38: #{tpu_custom_call.1} parent=1 // pred_check
      _
    $region39: #{tpu_custom_call.1} parent=1 // pred_check_branch
      %108 = sbr.rel (0) target = $region41
    $region40: #{tpu_custom_call.1} parent=1 // pred_region
      %s110 = ssub.s32 2048, 2048
      %111 = vsyncadd [#allocation15], %s110
      %s112 = sshll.u32 [#allocation14], 4
      %s113 = int_to_ptr.vmem [resolvable:$true] %s112
      %118 = dma.hbm_to_vmem [thread:$0]  %s9, 2048, %s113, [#allocation15], 128, 128, 8
    $region41: #{tpu_custom_call.1} parent=1 // pred_fallthru
      _
    // Predicated region
    $region42: #{tpu_custom_call.1} parent=1 // pred_check
      _
    $region43: #{tpu_custom_call.1} parent=1 // pred_check_branch
      %120 = sbr.rel (0) target = $region45
    $region44: #{tpu_custom_call.1} parent=1 // pred_region
      %121 = dma.done [#allocation3], 256
    $region45: #{tpu_custom_call.1} parent=1 // pred_fallthru
      _
    // Predicated region
    $region46: #{tpu_custom_call.1} parent=1 // pred_check
      _
    $region47: #{tpu_custom_call.1} parent=1 // pred_check_branch
      %123 = sbr.rel (0) target = $region49
    $region48: #{tpu_custom_call.1} parent=1 // pred_region
      %124 = dma.done [#allocation6], 256
    $region49: #{tpu_custom_call.1} parent=1 // pred_fallthru
      _
    // Predicated region
    $region50: #{tpu_custom_call.1} parent=1 // pred_check
      _
    $region51: #{tpu_custom_call.1} parent=1 // pred_check_branch
      %126 = sbr.rel (0) target = $region53
    $region52: #{tpu_custom_call.1} parent=1 // pred_region
      %127 = dma.done [#allocation6], 1024
    $region53: #{tpu_custom_call.1} parent=1 // pred_fallthru
      _
    // Predicated region
    $region54: #{tpu_custom_call.1} parent=1 // pred_check
      _
    $region55: #{tpu_custom_call.1} parent=1 // pred_check_branch
      %129 = sbr.rel (0) target = $region57
    $region56: #{tpu_custom_call.1} parent=1 // pred_region
      %130 = dma.done [#allocation9], 256
    $region57: #{tpu_custom_call.1} parent=1 // pred_fallthru
      _
    // Predicated region
    $region58: #{tpu_custom_call.1} parent=1 // pred_check
      _
    $region59: #{tpu_custom_call.1} parent=1 // pred_check_branch
      %132 = sbr.rel (0) target = $region61
    $region60: #{tpu_custom_call.1} parent=1 // pred_region
      %133 = dma.done [#allocation9], 768
    $region61: #{tpu_custom_call.1} parent=1 // pred_fallthru
      _
    // Predicated region
    $region62: #{tpu_custom_call.1} parent=1 // pred_check
      _
    $region63: #{tpu_custom_call.1} parent=1 // pred_check_branch
      %135 = sbr.rel (0) target = $region65
    $region64: #{tpu_custom_call.1} parent=1 // pred_region
      %136 = dma.done [#allocation12], 2048
    $region65: #{tpu_custom_call.1} parent=1 // pred_fallthru
      _
    // Predicated region
    $region66: #{tpu_custom_call.1} parent=1 // pred_check
      _
    $region67: #{tpu_custom_call.1} parent=1 // pred_check_branch
      %138 = sbr.rel (0) target = $region69
    $region68: #{tpu_custom_call.1} parent=1 // pred_region
      %139 = dma.done [#allocation12], 2048
    $region69: #{tpu_custom_call.1} parent=1 // pred_fallthru
      _
    // Predicated region
    $region70: #{tpu_custom_call.1} parent=1 // pred_check
      _
    $region71: #{tpu_custom_call.1} parent=1 // pred_check_branch
      %141 = sbr.rel (0) target = $region73
    $region72: #{tpu_custom_call.1} parent=1 // pred_region
      %142 = dma.done [#allocation15], 2048
    $region73: #{tpu_custom_call.1} parent=1 // pred_fallthru
      _
    %v143 = vld [vmem:[#allocation5] sm:$0xff]
    %v144 = vld [vmem:[#allocation5 + $0x8] sm:$0xff]
    %v145 = vld [vmem:[#allocation2] sm:$0xff]
    %v146 = vld [vmem:[#allocation2 + $0x8] sm:$0xff]
    %v147 = vld [vmem:[%s0] sm:$0xff]
    %v148 = vld [vmem:[%s0 + $0x8] sm:$0xff]
    %v149 = vld [vmem:[#allocation8] sm:$0xff]
    %v150 = vld [vmem:[#allocation8 + $0x8] sm:$0xf]
    %vm151 = vcmask 97280
    %v153 = vsel %vm151, %v147, 0
    %v156 = vsel %vm151, %v148, 0
    %vm158 = vcmask 1043456
    %v160 = vsel %vm158, %v150, 0
    %162 = vmatprep.subr.mxu0 0.0
    %163 = vmatpush1.msra.mxu0 0.0
    %164 = vmatprep.subr.mxu0 0.0
    %165 = vmatpush1.msra.mxu0 0.0
    %166 = vmatprep.subr.mxu0 0.0
    %167 = vmatpush1.msra.mxu0 0.0
    %168 = vmatprep.subr.mxu0 0.0
    %169 = vmatpush1.msra.mxu0 0.0
    %170 = vmatprep.subr.mxu0 0.0
    %171 = vmatpush1.msra.mxu0 0.0
    %172 = vmatprep.subr.mxu0 0.0
    %173 = vmatpush1.msra.mxu0 0.0
    %174 = vmatprep.subr.mxu0 0.0
    %175 = vmatpush1.msra.mxu0 0.0
    %176 = vmatprep.subr.mxu0 0.0
    %177 = vmatpush1.msra.mxu0 0.0
    %178 = vmatprep.subr.mxu0 0.0
    %179 = vmatpush1.msra.mxu0 0.0
    %180 = vmatprep.subr.mxu0 0.0
    %181 = vmatpush1.msra.mxu0 0.0
    %182 = vmatprep.subr.mxu0 0.0
    %183 = vmatpush1.msra.mxu0 0.0
    %184 = vmatprep.subr.mxu0 0.0
    %185 = vmatpush1.msra.mxu0 0.0
    %186 = vmatprep.subr.mxu0 0.0
    %187 = vmatpush1.msra.mxu0 0.0
    %188 = vmatprep.subr.mxu0 0.0
    %189 = vmatpush1.msra.mxu0 0.0
    %190 = vmatprep.subr.mxu0 0.0
    %191 = vmatpush1.msra.mxu0 %v160
    %192 = vmatprep.subr.mxu0 0.0
    %193 = vmatpush1.msra.mxu0 %v149
    %194 = vmatprep.subr.mxu0 0.0
    %195 = vmatpush2.msra.mxu0 0.0
    %196 = vmatprep.subr.mxu0 0.0
    %197 = vmatpush2.msra.mxu0 0.0
    %198 = vmatprep.subr.mxu0 0.0
    %199 = vmatpush2.msra.mxu0 0.0
    %200 = vmatprep.subr.mxu0 0.0
    %201 = vmatpush2.msra.mxu0 0.0
    %202 = vmatprep.subr.mxu0 0.0
    %203 = vmatpush2.msra.mxu0 0.0
    %204 = vmatprep.subr.mxu0 0.0
    %205 = vmatpush2.msra.mxu0 0.0
    %206 = vmatprep.subr.mxu0 0.0
    %207 = vmatpush2.msra.mxu0 0.0
    %208 = vmatprep.subr.mxu0 0.0
    %209 = vmatpush2.msra.mxu0 0.0
    %210 = vmatprep.subr.mxu0 0.0
    %211 = vmatpush2.msra.mxu0 0.0
    %212 = vmatprep.subr.mxu0 0.0
    %213 = vmatpush2.msra.mxu0 0.0
    %214 = vmatprep.subr.mxu0 0.0
    %215 = vmatpush2.msra.mxu0 0.0
    %216 = vmatprep.subr.mxu0 0.0
    %217 = vmatpush2.msra.mxu0 0.0
    %218 = vmatprep.subr.mxu0 0.0
    %219 = vmatpush2.msra.mxu0 0.0
    %220 = vmatprep.subr.mxu0 0.0
    %221 = vmatpush2.msra.mxu0 0.0
    %222 = vmatprep.subr.mxu0 0.0
    %223 = vmatpush2.msra.mxu0 0.0
    %224 = vmatprep.subr.mxu0 0.0
    %225 = vmatpush2.msra.mxu0 0.0
    %226 = vmatprep.mubr.f32.mxu0 0.0
    %227 = vmatmul.mubr.f32.gmra.mxu0 %v153
    %v228 = vpop.f32.mrf.mxu0
    %v229 = vadd.f32 0.0, %v228
    %v230 = vpop.f32.mrf.mxu0
    %231 = vmatprep.mubr.f32.mxu0 0.0
    %232 = vmatmul.mubr.f32.gmra.mxu0 %v156
    %v233 = vpop.f32.mrf.mxu0
    %v234 = vadd.f32 0.0, %v233
    %v235 = vpop.f32.mrf.mxu0
    %236 = vdwg.mxu0
    %v237 = vld [vmem:[%s5] sm:$0xff]
    %v238 = vld [vmem:[%s5 + $0x8] sm:$0xff]
    %v239 = vld [vmem:[%s5 + $0x10] sm:$0xff]
    %vm240 = vcmask 195584
    %v241 = vsel %vm240, %v229, 0.0
    %v242 = vsel %vm240, %v234, 0.0
    %v243 = vadd.f32 %v241, %v242
    %v244 = vrot.slane %v243, 4
    %v245 = vadd.f32 %v243, %v244
    %v246 = vrot.slane %v245, 2
    %v247 = vadd.f32 %v245, %v246
    %v248 = vrot.slane %v247, 1
    %v249 = vadd.f32 %v247, %v248
    %v250 = vmul.f32 %v229, %v229
    %v251 = vmul.f32 %v234, %v234
    %v252 = vsel %vm240, %v250, 0.0
    %v253 = vsel %vm240, %v251, 0.0
    %v254 = vadd.f32 %v252, %v253
    %v255 = vrot.slane %v254, 4
    %v256 = vadd.f32 %v254, %v255
    %v257 = vrot.slane %v256, 2
    %v258 = vadd.f32 %v256, %v257
    %v259 = vrot.slane %v258, 1
    %v260 = vadd.f32 %v258, %v259
    %v262 = vsel %vm240, %v249, 0
    %264 = vmatprep.subr.mxu0 0.0
    %265 = vmatpush1.msra.mxu0 0.0
    %266 = vmatprep.subr.mxu0 0.0
    %267 = vmatpush1.msra.mxu0 0.0
    %268 = vmatprep.subr.mxu0 0.0
    %269 = vmatpush1.msra.mxu0 0.0
    %270 = vmatprep.subr.mxu0 0.0
    %271 = vmatpush1.msra.mxu0 0.0
    %272 = vmatprep.subr.mxu0 0.0
    %273 = vmatpush1.msra.mxu0 0.0
    %274 = vmatprep.subr.mxu0 0.0
    %275 = vmatpush1.msra.mxu0 0.0
    %276 = vmatprep.subr.mxu0 0.0
    %277 = vmatpush1.msra.mxu0 0.0
    %278 = vmatprep.subr.mxu0 0.0
    %279 = vmatpush1.msra.mxu0 0.0
    %280 = vmatprep.subr.mxu0 0.0
    %281 = vmatpush1.msra.mxu0 0.0
    %282 = vmatprep.subr.mxu0 0.0
    %283 = vmatpush1.msra.mxu0 0.0
    %284 = vmatprep.subr.mxu0 0.0
    %285 = vmatpush1.msra.mxu0 0.0
    %286 = vmatprep.subr.mxu0 0.0
    %287 = vmatpush1.msra.mxu0 0.0
    %288 = vmatprep.subr.mxu0 0.0
    %289 = vmatpush1.msra.mxu0 0.0
    %290 = vmatprep.subr.mxu0 0.0
    %291 = vmatpush1.msra.mxu0 %v239
    %292 = vmatprep.subr.mxu0 0.0
    %293 = vmatpush1.msra.mxu0 %v238
    %294 = vmatprep.subr.mxu0 0.0
    %295 = vmatpush1.msra.mxu0 %v237
    %296 = vmatprep.subr.mxu0 0.0
    %297 = vmatpush2.msra.mxu0 0.0
    %298 = vmatprep.subr.mxu0 0.0
    %299 = vmatpush2.msra.mxu0 0.0
    %300 = vmatprep.subr.mxu0 0.0
    %301 = vmatpush2.msra.mxu0 0.0
    %302 = vmatprep.subr.mxu0 0.0
    %303 = vmatpush2.msra.mxu0 0.0
    %304 = vmatprep.subr.mxu0 0.0
    %305 = vmatpush2.msra.mxu0 0.0
    %306 = vmatprep.subr.mxu0 0.0
    %307 = vmatpush2.msra.mxu0 0.0
    %308 = vmatprep.subr.mxu0 0.0
    %309 = vmatpush2.msra.mxu0 0.0
    %310 = vmatprep.subr.mxu0 0.0
    %311 = vmatpush2.msra.mxu0 0.0
    %312 = vmatprep.subr.mxu0 0.0
    %313 = vmatpush2.msra.mxu0 0.0
    %314 = vmatprep.subr.mxu0 0.0
    %315 = vmatpush2.msra.mxu0 0.0
    %316 = vmatprep.subr.mxu0 0.0
    %317 = vmatpush2.msra.mxu0 0.0
    %318 = vmatprep.subr.mxu0 0.0
    %319 = vmatpush2.msra.mxu0 0.0
    %320 = vmatprep.subr.mxu0 0.0
    %321 = vmatpush2.msra.mxu0 0.0
    %322 = vmatprep.subr.mxu0 0.0
    %323 = vmatpush2.msra.mxu0 0.0
    %324 = vmatprep.subr.mxu0 0.0
    %325 = vmatpush2.msra.mxu0 0.0
    %326 = vmatprep.subr.mxu0 0.0
    %327 = vmatpush2.msra.mxu0 0.0
    %328 = vmatprep.mubr.f32.mxu0 0.0
    %329 = vmatmul.mubr.f32.gmra.mxu0 %v262
    %v330 = vpop.f32.mrf.mxu0
    %v331 = vadd.f32 0.0, %v330
    %v332 = vpop.f32.mrf.mxu0
    %333 = vdwg.mxu0
    %v334 = vmul.f32 %v331, 0.020833334
    %v336 = vsel %vm240, %v260, 0
    %338 = vmatprep.subr.mxu0 0.0
    %339 = vmatpush1.msra.mxu0 0.0
    %340 = vmatprep.subr.mxu0 0.0
    %341 = vmatpush1.msra.mxu0 0.0
    %342 = vmatprep.subr.mxu0 0.0
    %343 = vmatpush1.msra.mxu0 0.0
    %344 = vmatprep.subr.mxu0 0.0
    %345 = vmatpush1.msra.mxu0 0.0
    %346 = vmatprep.subr.mxu0 0.0
    %347 = vmatpush1.msra.mxu0 0.0
    %348 = vmatprep.subr.mxu0 0.0
    %349 = vmatpush1.msra.mxu0 0.0
    %350 = vmatprep.subr.mxu0 0.0
    %351 = vmatpush1.msra.mxu0 0.0
    %352 = vmatprep.subr.mxu0 0.0
    %353 = vmatpush1.msra.mxu0 0.0
    %354 = vmatprep.subr.mxu0 0.0
    %355 = vmatpush1.msra.mxu0 0.0
    %356 = vmatprep.subr.mxu0 0.0
    %357 = vmatpush1.msra.mxu0 0.0
    %358 = vmatprep.subr.mxu0 0.0
    %359 = vmatpush1.msra.mxu0 0.0
    %360 = vmatprep.subr.mxu0 0.0
    %361 = vmatpush1.msra.mxu0 0.0
    %362 = vmatprep.subr.mxu0 0.0
    %363 = vmatpush1.msra.mxu0 0.0
    %364 = vmatprep.subr.mxu0 0.0
    %365 = vmatpush1.msra.mxu0 %v239
    %366 = vmatprep.subr.mxu0 0.0
    %367 = vmatpush1.msra.mxu0 %v238
    %368 = vmatprep.subr.mxu0 0.0
    %369 = vmatpush1.msra.mxu0 %v237
    %370 = vmatprep.subr.mxu0 0.0
    %371 = vmatpush2.msra.mxu0 0.0
    %372 = vmatprep.subr.mxu0 0.0
    %373 = vmatpush2.msra.mxu0 0.0
    %374 = vmatprep.subr.mxu0 0.0
    %375 = vmatpush2.msra.mxu0 0.0
    %376 = vmatprep.subr.mxu0 0.0
    %377 = vmatpush2.msra.mxu0 0.0
    %378 = vmatprep.subr.mxu0 0.0
    %379 = vmatpush2.msra.mxu0 0.0
    %380 = vmatprep.subr.mxu0 0.0
    %381 = vmatpush2.msra.mxu0 0.0
    %382 = vmatprep.subr.mxu0 0.0
    %383 = vmatpush2.msra.mxu0 0.0
    %384 = vmatprep.subr.mxu0 0.0
    %385 = vmatpush2.msra.mxu0 0.0
    %386 = vmatprep.subr.mxu0 0.0
    %387 = vmatpush2.msra.mxu0 0.0
    %388 = vmatprep.subr.mxu0 0.0
    %389 = vmatpush2.msra.mxu0 0.0
    %390 = vmatprep.subr.mxu0 0.0
    %391 = vmatpush2.msra.mxu0 0.0
    %392 = vmatprep.subr.mxu0 0.0
    %393 = vmatpush2.msra.mxu0 0.0
    %394 = vmatprep.subr.mxu0 0.0
    %395 = vmatpush2.msra.mxu0 0.0
    %396 = vmatprep.subr.mxu0 0.0
    %397 = vmatpush2.msra.mxu0 0.0
    %398 = vmatprep.subr.mxu0 0.0
    %399 = vmatpush2.msra.mxu0 0.0
    %400 = vmatprep.subr.mxu0 0.0
    %401 = vmatpush2.msra.mxu0 0.0
    %402 = vmatprep.mubr.f32.mxu0 0.0
    %403 = vmatmul.mubr.f32.gmra.mxu0 %v336
    %v404 = vpop.f32.mrf.mxu0
    %v405 = vadd.f32 0.0, %v404
    %v406 = vpop.f32.mrf.mxu0
    %407 = vdwg.mxu0
    %v408 = vmul.f32 %v405, 0.020833334
    %v409 = vmul.f32 %v334, %v334
    %v410 = vsub.f32 %v408, %v409
    %v411 = vadd.f32 %v410, 1e-05
    %v412 = vrsqrt.pop %v411
    %v414 = vrot.slane %v412, 7
    %v416 = vmul.f32 %v143, %v414
    %v418 = vrot.slane %v416, 1
    %v420 = vmul.f32 %v334, %v418
    %v422 = vrot.slane %v420, 6
    %v424 = vsub.f32 %v143, %v422
    %v425 = vlaneseq
    %v426 = vshrl.u32 %v425, 7
    %v427 = vsub.s32 1, %v426
    %v428 = vrot.slane %v416, %v427
    %v429 = vmul.f32 %v229, %v428
    %v430 = vmul.f32 %v234, %v428
    %v431 = vlaneseq
    %v432 = vshrl.u32 %v431, 7
    %v433 = vsub.s32 2, %v432
    %v434 = vrot.slane %v424, %v433
    %v435 = vadd.f32 %v429, %v434
    %v436 = vadd.f32 %v430, %v434
    %v437 = vmax.f32 %v435, 0.0
    %v438 = vmax.f32 %v436, 0.0
    %v439 = vld [vmem:[#allocation7] sm:$0xff]
    %v440 = vld [vmem:[#allocation7 + $0x8] sm:$0xff]
    %v441 = vld [vmem:[#allocation7 + $0x10] sm:$0xff]
    %v442 = vld [vmem:[#allocation7 + $0x18] sm:$0xff]
    %v443 = vld [vmem:[#allocation7 + $0x20] sm:$0xff]
    %v444 = vld [vmem:[#allocation7 + $0x28] sm:$0xff]
    %v445 = vld [vmem:[#allocation7 + $0x30] sm:$0xff]
    %v446 = vld [vmem:[#allocation7 + $0x38] sm:$0xff]
    %v447 = vld [vmem:[#allocation10] sm:$0xff]
    %v448 = vld [vmem:[#allocation10 + $0x8] sm:$0xff]
    %v449 = vld [vmem:[#allocation10 + $0x10] sm:$0xff]
    %v450 = vld [vmem:[#allocation10 + $0x18] sm:$0xff]
    %v451 = vld [vmem:[#allocation10 + $0x20] sm:$0xff]
    %v452 = vld [vmem:[#allocation10 + $0x28] sm:$0xff]
    %v454 = vsel %vm240, %v437, 0
    %v457 = vsel %vm240, %v438, 0
    %459 = vmatprep.subr.mxu0 0.0
    %460 = vmatpush1.msra.mxu0 0.0
    %461 = vmatprep.subr.mxu0 0.0
    %462 = vmatpush1.msra.mxu0 0.0
    %463 = vmatprep.subr.mxu0 0.0
    %464 = vmatpush1.msra.mxu0 0.0
    %465 = vmatprep.subr.mxu0 0.0
    %466 = vmatpush1.msra.mxu0 0.0
    %467 = vmatprep.subr.mxu0 0.0
    %468 = vmatpush1.msra.mxu0 0.0
    %469 = vmatprep.subr.mxu0 0.0
    %470 = vmatpush1.msra.mxu0 0.0
    %471 = vmatprep.subr.mxu0 0.0
    %472 = vmatpush1.msra.mxu0 0.0
    %473 = vmatprep.subr.mxu0 0.0
    %474 = vmatpush1.msra.mxu0 0.0
    %475 = vmatprep.subr.mxu0 0.0
    %476 = vmatpush1.msra.mxu0 0.0
    %477 = vmatprep.subr.mxu0 0.0
    %478 = vmatpush1.msra.mxu0 0.0
    %479 = vmatprep.subr.mxu0 0.0
    %480 = vmatpush1.msra.mxu0 0.0
    %481 = vmatprep.subr.mxu0 0.0
    %482 = vmatpush1.msra.mxu0 0.0
    %483 = vmatprep.subr.mxu0 0.0
    %484 = vmatpush1.msra.mxu0 0.0
    %485 = vmatprep.subr.mxu0 %v452
    %486 = vmatpush1.msra.mxu0 %v451
    %487 = vmatprep.subr.mxu0 %v450
    %488 = vmatpush1.msra.mxu0 %v449
    %489 = vmatprep.subr.mxu0 %v448
    %490 = vmatpush1.msra.mxu0 %v447
    %491 = vmatprep.subr.mxu0 0.0
    %492 = vmatpush2.msra.mxu0 0.0
    %493 = vmatprep.subr.mxu0 0.0
    %494 = vmatpush2.msra.mxu0 0.0
    %495 = vmatprep.subr.mxu0 0.0
    %496 = vmatpush2.msra.mxu0 0.0
    %497 = vmatprep.subr.mxu0 0.0
    %498 = vmatpush2.msra.mxu0 0.0
    %499 = vmatprep.subr.mxu0 0.0
    %500 = vmatpush2.msra.mxu0 0.0
    %501 = vmatprep.subr.mxu0 0.0
    %502 = vmatpush2.msra.mxu0 0.0
    %503 = vmatprep.subr.mxu0 0.0
    %504 = vmatpush2.msra.mxu0 0.0
    %505 = vmatprep.subr.mxu0 0.0
    %506 = vmatpush2.msra.mxu0 0.0
    %507 = vmatprep.subr.mxu0 0.0
    %508 = vmatpush2.msra.mxu0 0.0
    %509 = vmatprep.subr.mxu0 0.0
    %510 = vmatpush2.msra.mxu0 0.0
    %511 = vmatprep.subr.mxu0 0.0
    %512 = vmatpush2.msra.mxu0 0.0
    %513 = vmatprep.subr.mxu0 0.0
    %514 = vmatpush2.msra.mxu0 0.0
    %515 = vmatprep.subr.mxu0 0.0
    %516 = vmatpush2.msra.mxu0 0.0
    %517 = vmatprep.subr.mxu0 0.0
    %518 = vmatpush2.msra.mxu0 0.0
    %519 = vmatprep.subr.mxu0 0.0
    %520 = vmatpush2.msra.mxu0 0.0
    %521 = vmatprep.subr.mxu0 0.0
    %522 = vmatpush2.msra.mxu0 0.0
    %523 = vmatprep.mubr.f32.mxu0 0.0
    %524 = vmatmul.mubr.f32.gmra.mxu0 %v454
    %v525 = vpop.f32.mrf.mxu0
    %v526 = vadd.f32 0.0, %v525
    %v527 = vpop.f32.mrf.mxu0
    %v528 = vadd.f32 0.0, %v527
    %529 = vmatprep.mubr.f32.mxu0 0.0
    %530 = vmatmul.mubr.f32.gmra.mxu0 %v457
    %v531 = vpop.f32.mrf.mxu0
    %v532 = vadd.f32 0.0, %v531
    %v533 = vpop.f32.mrf.mxu0
    %v534 = vadd.f32 0.0, %v533
    %535 = vdwg.mxu0
    %vm536 = vcmask 261120
    %v538 = vsel %vm536, %v145, 0
    %v541 = vsel %vm536, %v146, 0
    %543 = vmatprep.subr.mxu0 0.0
    %544 = vmatpush1.msra.mxu0 0.0
    %545 = vmatprep.subr.mxu0 0.0
    %546 = vmatpush1.msra.mxu0 0.0
    %547 = vmatprep.subr.mxu0 0.0
    %548 = vmatpush1.msra.mxu0 0.0
    %549 = vmatprep.subr.mxu0 0.0
    %550 = vmatpush1.msra.mxu0 0.0
    %551 = vmatprep.subr.mxu0 0.0
    %552 = vmatpush1.msra.mxu0 0.0
    %553 = vmatprep.subr.mxu0 0.0
    %554 = vmatpush1.msra.mxu0 0.0
    %555 = vmatprep.subr.mxu0 0.0
    %556 = vmatpush1.msra.mxu0 0.0
    %557 = vmatprep.subr.mxu0 0.0
    %558 = vmatpush1.msra.mxu0 0.0
    %559 = vmatprep.subr.mxu0 0.0
    %560 = vmatpush1.msra.mxu0 0.0
    %561 = vmatprep.subr.mxu0 0.0
    %562 = vmatpush1.msra.mxu0 0.0
    %563 = vmatprep.subr.mxu0 0.0
    %564 = vmatpush1.msra.mxu0 0.0
    %565 = vmatprep.subr.mxu0 0.0
    %566 = vmatpush1.msra.mxu0 0.0
    %567 = vmatprep.subr.mxu0 %v446
    %568 = vmatpush1.msra.mxu0 %v445
    %569 = vmatprep.subr.mxu0 %v444
    %570 = vmatpush1.msra.mxu0 %v443
    %571 = vmatprep.subr.mxu0 %v442
    %572 = vmatpush1.msra.mxu0 %v441
    %573 = vmatprep.subr.mxu0 %v440
    %574 = vmatpush1.msra.mxu0 %v439
    %575 = vmatprep.subr.mxu0 0.0
    %576 = vmatpush2.msra.mxu0 0.0
    %577 = vmatprep.subr.mxu0 0.0
    %578 = vmatpush2.msra.mxu0 0.0
    %579 = vmatprep.subr.mxu0 0.0
    %580 = vmatpush2.msra.mxu0 0.0
    %581 = vmatprep.subr.mxu0 0.0
    %582 = vmatpush2.msra.mxu0 0.0
    %583 = vmatprep.subr.mxu0 0.0
    %584 = vmatpush2.msra.mxu0 0.0
    %585 = vmatprep.subr.mxu0 0.0
    %586 = vmatpush2.msra.mxu0 0.0
    %587 = vmatprep.subr.mxu0 0.0
    %588 = vmatpush2.msra.mxu0 0.0
    %589 = vmatprep.subr.mxu0 0.0
    %590 = vmatpush2.msra.mxu0 0.0
    %591 = vmatprep.subr.mxu0 0.0
    %592 = vmatpush2.msra.mxu0 0.0
    %593 = vmatprep.subr.mxu0 0.0
    %594 = vmatpush2.msra.mxu0 0.0
    %595 = vmatprep.subr.mxu0 0.0
    %596 = vmatpush2.msra.mxu0 0.0
    %597 = vmatprep.subr.mxu0 0.0
    %598 = vmatpush2.msra.mxu0 0.0
    %599 = vmatprep.subr.mxu0 0.0
    %600 = vmatpush2.msra.mxu0 0.0
    %601 = vmatprep.subr.mxu0 0.0
    %602 = vmatpush2.msra.mxu0 0.0
    %603 = vmatprep.subr.mxu0 0.0
    %604 = vmatpush2.msra.mxu0 0.0
    %605 = vmatprep.subr.mxu0 0.0
    %606 = vmatpush2.msra.mxu0 0.0
    %607 = vmatprep.mubr.f32.mxu0 0.0
    %608 = vmatmul.mubr.f32.gmra.mxu0 %v538
    %v609 = vpop.f32.mrf.mxu0
    %v610 = vadd.f32 %v526, %v609
    %v611 = vpop.f32.mrf.mxu0
    %v612 = vadd.f32 %v528, %v611
    %613 = vmatprep.mubr.f32.mxu0 0.0
    %614 = vmatmul.mubr.f32.gmra.mxu0 %v541
    %v615 = vpop.f32.mrf.mxu0
    %v616 = vadd.f32 %v532, %v615
    %v617 = vpop.f32.mrf.mxu0
    %v618 = vadd.f32 %v534, %v617
    %619 = vdwg.mxu0
    %v620 = vlaneseq
    %v621 = vshrl.u32 %v620, 7
    %v622 = vsub.s32 0, %v621
    %v623 = vrot.slane %v143, %v622
    %v624 = vlaneseq
    %v625 = vshrl.u32 %v624, 7
    %v626 = vsub.s32 0, %v625
    %v627 = vrot.slane %v144, %v626
    %v628 = vadd.f32 %v610, %v623
    %v629 = vadd.f32 %v612, %v627
    %v630 = vadd.f32 %v616, %v623
    %v631 = vadd.f32 %v618, %v627
    %v632 = vld [vmem:[#allocation11] sm:$0xff]
    %v633 = vld [vmem:[#allocation11 + $0x8] sm:$0xff]
    %v634 = vld [vmem:[#allocation11 + $0x10] sm:$0xff]
    %v635 = vld [vmem:[#allocation11 + $0x18] sm:$0xff]
    %v636 = vld [vmem:[#allocation11 + $0x20] sm:$0xff]
    %v637 = vld [vmem:[#allocation11 + $0x28] sm:$0xff]
    %v638 = vld [vmem:[#allocation11 + $0x30] sm:$0xff]
    %v639 = vld [vmem:[#allocation11 + $0x38] sm:$0xff]
    %v640 = vld [vmem:[#allocation11 + $0x40] sm:$0xff]
    %v641 = vld [vmem:[#allocation11 + $0x48] sm:$0xff]
    %v642 = vld [vmem:[#allocation11 + $0x50] sm:$0xff]
    %v643 = vld [vmem:[#allocation11 + $0x58] sm:$0xff]
    %v644 = vld [vmem:[#allocation11 + $0x60] sm:$0xff]
    %v645 = vld [vmem:[#allocation11 + $0x68] sm:$0xff]
    %v646 = vld [vmem:[#allocation11 + $0x70] sm:$0xff]
    %v647 = vld [vmem:[#allocation11 + $0x78] sm:$0xff]
    %v648 = vadd.f32 %v628, %v630
    %v649 = vrot.slane %v648, 4
    %v650 = vadd.f32 %v648, %v649
    %v651 = vrot.slane %v650, 2
    %v652 = vadd.f32 %v650, %v651
    %v653 = vrot.slane %v652, 1
    %v654 = vadd.f32 %v652, %v653
    %v655 = vmul.f32 %v628, %v628
    %v656 = vmul.f32 %v630, %v630
    %v657 = vadd.f32 %v655, %v656
    %v658 = vrot.slane %v657, 4
    %v659 = vadd.f32 %v657, %v658
    %v660 = vrot.slane %v659, 2
    %v661 = vadd.f32 %v659, %v660
    %v662 = vrot.slane %v661, 1
    %v663 = vadd.f32 %v661, %v662
    %664 = vmatprep.subr.mxu0 0.0
    %665 = vmatpush1.msra.mxu0 %v647
    %666 = vmatprep.subr.mxu0 0.0
    %667 = vmatpush1.msra.mxu0 %v646
    %668 = vmatprep.subr.mxu0 0.0
    %669 = vmatpush1.msra.mxu0 %v645
    %670 = vmatprep.subr.mxu0 0.0
    %671 = vmatpush1.msra.mxu0 %v644
    %672 = vmatprep.subr.mxu0 0.0
    %673 = vmatpush1.msra.mxu0 %v643
    %674 = vmatprep.subr.mxu0 0.0
    %675 = vmatpush1.msra.mxu0 %v642
    %676 = vmatprep.subr.mxu0 0.0
    %677 = vmatpush1.msra.mxu0 %v641
    %678 = vmatprep.subr.mxu0 0.0
    %679 = vmatpush1.msra.mxu0 %v640
    %680 = vmatprep.subr.mxu0 0.0
    %681 = vmatpush1.msra.mxu0 %v639
    %682 = vmatprep.subr.mxu0 0.0
    %683 = vmatpush1.msra.mxu0 %v638
    %684 = vmatprep.subr.mxu0 0.0
    %685 = vmatpush1.msra.mxu0 %v637
    %686 = vmatprep.subr.mxu0 0.0
    %687 = vmatpush1.msra.mxu0 %v636
    %688 = vmatprep.subr.mxu0 0.0
    %689 = vmatpush1.msra.mxu0 %v635
    %690 = vmatprep.subr.mxu0 0.0
    %691 = vmatpush1.msra.mxu0 %v634
    %692 = vmatprep.subr.mxu0 0.0
    %693 = vmatpush1.msra.mxu0 %v633
    %694 = vmatprep.subr.mxu0 0.0
    %695 = vmatpush1.msra.mxu0 %v632
    %696 = vmatprep.subr.mxu0 0.0
    %697 = vmatpush2.msra.mxu0 0.0
    %698 = vmatprep.subr.mxu0 0.0
    %699 = vmatpush2.msra.mxu0 0.0
    %700 = vmatprep.subr.mxu0 0.0
    %701 = vmatpush2.msra.mxu0 0.0
    %702 = vmatprep.subr.mxu0 0.0
    %703 = vmatpush2.msra.mxu0 0.0
    %704 = vmatprep.subr.mxu0 0.0
    %705 = vmatpush2.msra.mxu0 0.0
    %706 = vmatprep.subr.mxu0 0.0
    %707 = vmatpush2.msra.mxu0 0.0
    %708 = vmatprep.subr.mxu0 0.0
    %709 = vmatpush2.msra.mxu0 0.0
    %710 = vmatprep.subr.mxu0 0.0
    %711 = vmatpush2.msra.mxu0 0.0
    %712 = vmatprep.subr.mxu0 0.0
    %713 = vmatpush2.msra.mxu0 0.0
    %714 = vmatprep.subr.mxu0 0.0
    %715 = vmatpush2.msra.mxu0 0.0
    %716 = vmatprep.subr.mxu0 0.0
    %717 = vmatpush2.msra.mxu0 0.0
    %718 = vmatprep.subr.mxu0 0.0
    %719 = vmatpush2.msra.mxu0 0.0
    %720 = vmatprep.subr.mxu0 0.0
    %721 = vmatpush2.msra.mxu0 0.0
    %722 = vmatprep.subr.mxu0 0.0
    %723 = vmatpush2.msra.mxu0 0.0
    %724 = vmatprep.subr.mxu0 0.0
    %725 = vmatpush2.msra.mxu0 0.0
    %726 = vmatprep.subr.mxu0 0.0
    %727 = vmatpush2.msra.mxu0 0.0
    %728 = vmatprep.mubr.f32.mxu0 0.0
    %729 = vmatmul.mubr.f32.gmra.mxu0 %v654
    %v730 = vpop.f32.mrf.mxu0
    %v731 = vadd.f32 0.0, %v730
    %v732 = vpop.f32.mrf.mxu0
    %733 = vdwg.mxu0
    %v734 = vmul.f32 %v731, 0.00390625
    %735 = vmatprep.subr.mxu0 0.0
    %736 = vmatpush1.msra.mxu0 %v647
    %737 = vmatprep.subr.mxu0 0.0
    %738 = vmatpush1.msra.mxu0 %v646
    %739 = vmatprep.subr.mxu0 0.0
    %740 = vmatpush1.msra.mxu0 %v645
    %741 = vmatprep.subr.mxu0 0.0
    %742 = vmatpush1.msra.mxu0 %v644
    %743 = vmatprep.subr.mxu0 0.0
    %744 = vmatpush1.msra.mxu0 %v643
    %745 = vmatprep.subr.mxu0 0.0
    %746 = vmatpush1.msra.mxu0 %v642
    %747 = vmatprep.subr.mxu0 0.0
    %748 = vmatpush1.msra.mxu0 %v641
    %749 = vmatprep.subr.mxu0 0.0
    %750 = vmatpush1.msra.mxu0 %v640
    %751 = vmatprep.subr.mxu0 0.0
    %752 = vmatpush1.msra.mxu0 %v639
    %753 = vmatprep.subr.mxu0 0.0
    %754 = vmatpush1.msra.mxu0 %v638
    %755 = vmatprep.subr.mxu0 0.0
    %756 = vmatpush1.msra.mxu0 %v637
    %757 = vmatprep.subr.mxu0 0.0
    %758 = vmatpush1.msra.mxu0 %v636
    %759 = vmatprep.subr.mxu0 0.0
    %760 = vmatpush1.msra.mxu0 %v635
    %761 = vmatprep.subr.mxu0 0.0
    %762 = vmatpush1.msra.mxu0 %v634
    %763 = vmatprep.subr.mxu0 0.0
    %764 = vmatpush1.msra.mxu0 %v633
    %765 = vmatprep.subr.mxu0 0.0
    %766 = vmatpush1.msra.mxu0 %v632
    %767 = vmatprep.subr.mxu0 0.0
    %768 = vmatpush2.msra.mxu0 0.0
    %769 = vmatprep.subr.mxu0 0.0
    %770 = vmatpush2.msra.mxu0 0.0
    %771 = vmatprep.subr.mxu0 0.0
    %772 = vmatpush2.msra.mxu0 0.0
    %773 = vmatprep.subr.mxu0 0.0
    %774 = vmatpush2.msra.mxu0 0.0
    %775 = vmatprep.subr.mxu0 0.0
    %776 = vmatpush2.msra.mxu0 0.0
    %777 = vmatprep.subr.mxu0 0.0
    %778 = vmatpush2.msra.mxu0 0.0
    %779 = vmatprep.subr.mxu0 0.0
    %780 = vmatpush2.msra.mxu0 0.0
    %781 = vmatprep.subr.mxu0 0.0
    %782 = vmatpush2.msra.mxu0 0.0
    %783 = vmatprep.subr.mxu0 0.0
    %784 = vmatpush2.msra.mxu0 0.0
    %785 = vmatprep.subr.mxu0 0.0
    %786 = vmatpush2.msra.mxu0 0.0
    %787 = vmatprep.subr.mxu0 0.0
    %788 = vmatpush2.msra.mxu0 0.0
    %789 = vmatprep.subr.mxu0 0.0
    %790 = vmatpush2.msra.mxu0 0.0
    %791 = vmatprep.subr.mxu0 0.0
    %792 = vmatpush2.msra.mxu0 0.0
    %793 = vmatprep.subr.mxu0 0.0
    %794 = vmatpush2.msra.mxu0 0.0
    %795 = vmatprep.subr.mxu0 0.0
    %796 = vmatpush2.msra.mxu0 0.0
    %797 = vmatprep.subr.mxu0 0.0
    %798 = vmatpush2.msra.mxu0 0.0
    %799 = vmatprep.mubr.f32.mxu0 0.0
    %800 = vmatmul.mubr.f32.gmra.mxu0 %v663
    %v801 = vpop.f32.mrf.mxu0
    %v802 = vadd.f32 0.0, %v801
    %v803 = vpop.f32.mrf.mxu0
    %804 = vdwg.mxu0
    %v805 = vmul.f32 %v802, 0.00390625
    %v806 = vmul.f32 %v734, %v734
    %v807 = vsub.f32 %v805, %v806
    %v808 = vadd.f32 %v807, 1e-05
    %v809 = vrsqrt.pop %v808
    %v811 = vrot.slane %v809, 5
    %v813 = vmul.f32 %v143, %v811
    %v815 = vrot.slane %v813, 3
    %v817 = vmul.f32 %v734, %v815
    %v819 = vrot.slane %v817, 4
    %v821 = vsub.f32 %v143, %v819
    %v822 = vlaneseq
    %v823 = vshrl.u32 %v822, 7
    %v824 = vsub.s32 3, %v823
    %v825 = vrot.slane %v813, %v824
    %v826 = vmul.f32 %v628, %v825
    %v827 = vmul.f32 %v630, %v825
    %v828 = vlaneseq
    %v829 = vshrl.u32 %v828, 7
    %v830 = vsub.s32 4, %v829
    %v831 = vrot.slane %v821, %v830
    %v832 = vadd.f32 %v826, %v831
    %v833 = vadd.f32 %v827, %v831
    %v834 = vmax.f32 %v832, 0.0
    %v835 = vmax.f32 %v833, 0.0
    %v836 = vld [vmem:[#allocation13] sm:$0xff]
    %v837 = vld [vmem:[#allocation13 + $0x8] sm:$0xff]
    %v838 = vld [vmem:[#allocation13 + $0x10] sm:$0xff]
    %v839 = vld [vmem:[#allocation13 + $0x18] sm:$0xff]
    %v840 = vld [vmem:[#allocation13 + $0x20] sm:$0xff]
    %v841 = vld [vmem:[#allocation13 + $0x28] sm:$0xff]
    %v842 = vld [vmem:[#allocation13 + $0x30] sm:$0xff]
    %v843 = vld [vmem:[#allocation13 + $0x38] sm:$0xff]
    %v844 = vld [vmem:[#allocation13 + $0x40] sm:$0xff]
    %v845 = vld [vmem:[#allocation13 + $0x48] sm:$0xff]
    %v846 = vld [vmem:[#allocation13 + $0x50] sm:$0xff]
    %v847 = vld [vmem:[#allocation13 + $0x58] sm:$0xff]
    %v848 = vld [vmem:[#allocation13 + $0x60] sm:$0xff]
    %v849 = vld [vmem:[#allocation13 + $0x68] sm:$0xff]
    %v850 = vld [vmem:[#allocation13 + $0x70] sm:$0xff]
    %v851 = vld [vmem:[#allocation13 + $0x78] sm:$0xff]
    %852 = vmatprep.subr.mxu0 0.0
    %853 = vmatpush1.msra.mxu0 %v851
    %854 = vmatprep.subr.mxu0 0.0
    %855 = vmatpush1.msra.mxu0 %v850
    %856 = vmatprep.subr.mxu0 0.0
    %857 = vmatpush1.msra.mxu0 %v849
    %858 = vmatprep.subr.mxu0 0.0
    %859 = vmatpush1.msra.mxu0 %v848
    %860 = vmatprep.subr.mxu0 0.0
    %861 = vmatpush1.msra.mxu0 %v847
    %862 = vmatprep.subr.mxu0 0.0
    %863 = vmatpush1.msra.mxu0 %v846
    %864 = vmatprep.subr.mxu0 0.0
    %865 = vmatpush1.msra.mxu0 %v845
    %866 = vmatprep.subr.mxu0 0.0
    %867 = vmatpush1.msra.mxu0 %v844
    %868 = vmatprep.subr.mxu0 0.0
    %869 = vmatpush1.msra.mxu0 %v843
    %870 = vmatprep.subr.mxu0 0.0
    %871 = vmatpush1.msra.mxu0 %v842
    %872 = vmatprep.subr.mxu0 0.0
    %873 = vmatpush1.msra.mxu0 %v841
    %874 = vmatprep.subr.mxu0 0.0
    %875 = vmatpush1.msra.mxu0 %v840
    %876 = vmatprep.subr.mxu0 0.0
    %877 = vmatpush1.msra.mxu0 %v839
    %878 = vmatprep.subr.mxu0 0.0
    %879 = vmatpush1.msra.mxu0 %v838
    %880 = vmatprep.subr.mxu0 0.0
    %881 = vmatpush1.msra.mxu0 %v837
    %882 = vmatprep.subr.mxu0 0.0
    %883 = vmatpush1.msra.mxu0 %v836
    %884 = vmatprep.subr.mxu0 0.0
    %885 = vmatpush2.msra.mxu0 0.0
    %886 = vmatprep.subr.mxu0 0.0
    %887 = vmatpush2.msra.mxu0 0.0
    %888 = vmatprep.subr.mxu0 0.0
    %889 = vmatpush2.msra.mxu0 0.0
    %890 = vmatprep.subr.mxu0 0.0
    %891 = vmatpush2.msra.mxu0 0.0
    %892 = vmatprep.subr.mxu0 0.0
    %893 = vmatpush2.msra.mxu0 0.0
    %894 = vmatprep.subr.mxu0 0.0
    %895 = vmatpush2.msra.mxu0 0.0
    %896 = vmatprep.subr.mxu0 0.0
    %897 = vmatpush2.msra.mxu0 0.0
    %898 = vmatprep.subr.mxu0 0.0
    %899 = vmatpush2.msra.mxu0 0.0
    %900 = vmatprep.subr.mxu0 0.0
    %901 = vmatpush2.msra.mxu0 0.0
    %902 = vmatprep.subr.mxu0 0.0
    %903 = vmatpush2.msra.mxu0 0.0
    %904 = vmatprep.subr.mxu0 0.0
    %905 = vmatpush2.msra.mxu0 0.0
    %906 = vmatprep.subr.mxu0 0.0
    %907 = vmatpush2.msra.mxu0 0.0
    %908 = vmatprep.subr.mxu0 0.0
    %909 = vmatpush2.msra.mxu0 0.0
    %910 = vmatprep.subr.mxu0 0.0
    %911 = vmatpush2.msra.mxu0 0.0
    %912 = vmatprep.subr.mxu0 0.0
    %913 = vmatpush2.msra.mxu0 0.0
    %914 = vmatprep.subr.mxu0 0.0
    %915 = vmatpush2.msra.mxu0 0.0
    %916 = vmatprep.mubr.f32.mxu0 0.0
    %917 = vmatmul.mubr.f32.gmra.mxu0 %v834
    %v918 = vpop.f32.mrf.mxu0
    %v919 = vadd.f32 0.0, %v918
    %v920 = vpop.f32.mrf.mxu0
    %921 = vmatprep.mubr.f32.mxu0 0.0
    %922 = vmatmul.mubr.f32.gmra.mxu0 %v835
    %v923 = vpop.f32.mrf.mxu0
    %v924 = vadd.f32 0.0, %v923
    %v925 = vpop.f32.mrf.mxu0
    %926 = vdwg.mxu0
    %v927 = vadd.f32 %v919, %v924
    %v928 = vrot.slane %v927, 4
    %v929 = vadd.f32 %v927, %v928
    %v930 = vrot.slane %v929, 2
    %v931 = vadd.f32 %v929, %v930
    %v932 = vrot.slane %v931, 1
    %v933 = vadd.f32 %v931, %v932
    %v934 = vmul.f32 %v919, %v919
    %v935 = vmul.f32 %v924, %v924
    %v936 = vadd.f32 %v934, %v935
    %v937 = vrot.slane %v936, 4
    %v938 = vadd.f32 %v936, %v937
    %v939 = vrot.slane %v938, 2
    %v940 = vadd.f32 %v938, %v939
    %v941 = vrot.slane %v940, 1
    %v942 = vadd.f32 %v940, %v941
    %943 = vmatprep.subr.mxu0 0.0
    %944 = vmatpush1.msra.mxu0 %v647
    %945 = vmatprep.subr.mxu0 0.0
    %946 = vmatpush1.msra.mxu0 %v646
    %947 = vmatprep.subr.mxu0 0.0
    %948 = vmatpush1.msra.mxu0 %v645
    %949 = vmatprep.subr.mxu0 0.0
    %950 = vmatpush1.msra.mxu0 %v644
    %951 = vmatprep.subr.mxu0 0.0
    %952 = vmatpush1.msra.mxu0 %v643
    %953 = vmatprep.subr.mxu0 0.0
    %954 = vmatpush1.msra.mxu0 %v642
    %955 = vmatprep.subr.mxu0 0.0
    %956 = vmatpush1.msra.mxu0 %v641
    %957 = vmatprep.subr.mxu0 0.0
    %958 = vmatpush1.msra.mxu0 %v640
    %959 = vmatprep.subr.mxu0 0.0
    %960 = vmatpush1.msra.mxu0 %v639
    %961 = vmatprep.subr.mxu0 0.0
    %962 = vmatpush1.msra.mxu0 %v638
    %963 = vmatprep.subr.mxu0 0.0
    %964 = vmatpush1.msra.mxu0 %v637
    %965 = vmatprep.subr.mxu0 0.0
    %966 = vmatpush1.msra.mxu0 %v636
    %967 = vmatprep.subr.mxu0 0.0
    %968 = vmatpush1.msra.mxu0 %v635
    %969 = vmatprep.subr.mxu0 0.0
    %970 = vmatpush1.msra.mxu0 %v634
    %971 = vmatprep.subr.mxu0 0.0
    %972 = vmatpush1.msra.mxu0 %v633
    %973 = vmatprep.subr.mxu0 0.0
    %974 = vmatpush1.msra.mxu0 %v632
    %975 = vmatprep.subr.mxu0 0.0
    %976 = vmatpush2.msra.mxu0 0.0
    %977 = vmatprep.subr.mxu0 0.0
    %978 = vmatpush2.msra.mxu0 0.0
    %979 = vmatprep.subr.mxu0 0.0
    %980 = vmatpush2.msra.mxu0 0.0
    %981 = vmatprep.subr.mxu0 0.0
    %982 = vmatpush2.msra.mxu0 0.0
    %983 = vmatprep.subr.mxu0 0.0
    %984 = vmatpush2.msra.mxu0 0.0
    %985 = vmatprep.subr.mxu0 0.0
    %986 = vmatpush2.msra.mxu0 0.0
    %987 = vmatprep.subr.mxu0 0.0
    %988 = vmatpush2.msra.mxu0 0.0
    %989 = vmatprep.subr.mxu0 0.0
    %990 = vmatpush2.msra.mxu0 0.0
    %991 = vmatprep.subr.mxu0 0.0
    %992 = vmatpush2.msra.mxu0 0.0
    %993 = vmatprep.subr.mxu0 0.0
    %994 = vmatpush2.msra.mxu0 0.0
    %995 = vmatprep.subr.mxu0 0.0
    %996 = vmatpush2.msra.mxu0 0.0
    %997 = vmatprep.subr.mxu0 0.0
    %998 = vmatpush2.msra.mxu0 0.0
    %999 = vmatprep.subr.mxu0 0.0
    %1000 = vmatpush2.msra.mxu0 0.0
    %1001 = vmatprep.subr.mxu0 0.0
    %1002 = vmatpush2.msra.mxu0 0.0
    %1003 = vmatprep.subr.mxu0 0.0
    %1004 = vmatpush2.msra.mxu0 0.0
    %1005 = vmatprep.subr.mxu0 0.0
    %1006 = vmatpush2.msra.mxu0 0.0
    %1007 = vmatprep.mubr.f32.mxu0 0.0
    %1008 = vmatmul.mubr.f32.gmra.mxu0 %v933
    %v1009 = vpop.f32.mrf.mxu0
    %v1010 = vadd.f32 0.0, %v1009
    %v1011 = vpop.f32.mrf.mxu0
    %1012 = vdwg.mxu0
    %v1013 = vmul.f32 %v1010, 0.00390625
    %1014 = vmatprep.subr.mxu0 0.0
    %1015 = vmatpush1.msra.mxu0 %v647
    %1016 = vmatprep.subr.mxu0 0.0
    %1017 = vmatpush1.msra.mxu0 %v646
    %1018 = vmatprep.subr.mxu0 0.0
    %1019 = vmatpush1.msra.mxu0 %v645
    %1020 = vmatprep.subr.mxu0 0.0
    %1021 = vmatpush1.msra.mxu0 %v644
    %1022 = vmatprep.subr.mxu0 0.0
    %1023 = vmatpush1.msra.mxu0 %v643
    %1024 = vmatprep.subr.mxu0 0.0
    %1025 = vmatpush1.msra.mxu0 %v642
    %1026 = vmatprep.subr.mxu0 0.0
    %1027 = vmatpush1.msra.mxu0 %v641
    %1028 = vmatprep.subr.mxu0 0.0
    %1029 = vmatpush1.msra.mxu0 %v640
    %1030 = vmatprep.subr.mxu0 0.0
    %1031 = vmatpush1.msra.mxu0 %v639
    %1032 = vmatprep.subr.mxu0 0.0
    %1033 = vmatpush1.msra.mxu0 %v638
    %1034 = vmatprep.subr.mxu0 0.0
    %1035 = vmatpush1.msra.mxu0 %v637
    %1036 = vmatprep.subr.mxu0 0.0
    %1037 = vmatpush1.msra.mxu0 %v636
    %1038 = vmatprep.subr.mxu0 0.0
    %1039 = vmatpush1.msra.mxu0 %v635
    %1040 = vmatprep.subr.mxu0 0.0
    %1041 = vmatpush1.msra.mxu0 %v634
    %1042 = vmatprep.subr.mxu0 0.0
    %1043 = vmatpush1.msra.mxu0 %v633
    %1044 = vmatprep.subr.mxu0 0.0
    %1045 = vmatpush1.msra.mxu0 %v632
    %1046 = vmatprep.subr.mxu0 0.0
    %1047 = vmatpush2.msra.mxu0 0.0
    %1048 = vmatprep.subr.mxu0 0.0
    %1049 = vmatpush2.msra.mxu0 0.0
    %1050 = vmatprep.subr.mxu0 0.0
    %1051 = vmatpush2.msra.mxu0 0.0
    %1052 = vmatprep.subr.mxu0 0.0
    %1053 = vmatpush2.msra.mxu0 0.0
    %1054 = vmatprep.subr.mxu0 0.0
    %1055 = vmatpush2.msra.mxu0 0.0
    %1056 = vmatprep.subr.mxu0 0.0
    %1057 = vmatpush2.msra.mxu0 0.0
    %1058 = vmatprep.subr.mxu0 0.0
    %1059 = vmatpush2.msra.mxu0 0.0
    %1060 = vmatprep.subr.mxu0 0.0
    %1061 = vmatpush2.msra.mxu0 0.0
    %1062 = vmatprep.subr.mxu0 0.0
    %1063 = vmatpush2.msra.mxu0 0.0
    %1064 = vmatprep.subr.mxu0 0.0
    %1065 = vmatpush2.msra.mxu0 0.0
    %1066 = vmatprep.subr.mxu0 0.0
    %1067 = vmatpush2.msra.mxu0 0.0
    %1068 = vmatprep.subr.mxu0 0.0
    %1069 = vmatpush2.msra.mxu0 0.0
    %1070 = vmatprep.subr.mxu0 0.0
    %1071 = vmatpush2.msra.mxu0 0.0
    %1072 = vmatprep.subr.mxu0 0.0
    %1073 = vmatpush2.msra.mxu0 0.0
    %1074 = vmatprep.subr.mxu0 0.0
    %1075 = vmatpush2.msra.mxu0 0.0
    %1076 = vmatprep.subr.mxu0 0.0
    %1077 = vmatpush2.msra.mxu0 0.0
    %1078 = vmatprep.mubr.f32.mxu0 0.0
    %1079 = vmatmul.mubr.f32.gmra.mxu0 %v942
    %v1080 = vpop.f32.mrf.mxu0
    %v1081 = vadd.f32 0.0, %v1080
    %v1082 = vpop.f32.mrf.mxu0
    %1083 = vdwg.mxu0
    %v1084 = vmul.f32 %v1081, 0.00390625
    %v1085 = vmul.f32 %v1013, %v1013
    %v1086 = vsub.f32 %v1084, %v1085
    %v1087 = vadd.f32 %v1086, 1e-05
    %v1088 = vrsqrt.pop %v1087
    %v1090 = vrot.slane %v1088, 3
    %v1092 = vmul.f32 %v143, %v1090
    %v1094 = vrot.slane %v1092, 5
    %v1096 = vmul.f32 %v1013, %v1094
    %v1098 = vrot.slane %v1096, 2
    %v1100 = vsub.f32 %v143, %v1098
    %v1101 = vlaneseq
    %v1102 = vshrl.u32 %v1101, 7
    %v1103 = vsub.s32 5, %v1102
    %v1104 = vrot.slane %v1092, %v1103
    %v1105 = vmul.f32 %v919, %v1104
    %v1106 = vmul.f32 %v924, %v1104
    %v1107 = vlaneseq
    %v1108 = vshrl.u32 %v1107, 7
    %v1109 = vsub.s32 6, %v1108
    %v1110 = vrot.slane %v1100, %v1109
    %v1111 = vadd.f32 %v1105, %v1110
    %v1112 = vadd.f32 %v1106, %v1110
    %v1113 = vmax.f32 %v1111, 0.0
    %v1114 = vmax.f32 %v1112, 0.0
    %v1115 = vld [vmem:[#allocation14] sm:$0xff]
    %v1116 = vld [vmem:[#allocation14 + $0x8] sm:$0xff]
    %v1117 = vld [vmem:[#allocation14 + $0x10] sm:$0xff]
    %v1118 = vld [vmem:[#allocation14 + $0x18] sm:$0xff]
    %v1119 = vld [vmem:[#allocation14 + $0x20] sm:$0xff]
    %v1120 = vld [vmem:[#allocation14 + $0x28] sm:$0xff]
    %v1121 = vld [vmem:[#allocation14 + $0x30] sm:$0xff]
    %v1122 = vld [vmem:[#allocation14 + $0x38] sm:$0xff]
    %v1123 = vld [vmem:[#allocation14 + $0x40] sm:$0xff]
    %v1124 = vld [vmem:[#allocation14 + $0x48] sm:$0xff]
    %v1125 = vld [vmem:[#allocation14 + $0x50] sm:$0xff]
    %v1126 = vld [vmem:[#allocation14 + $0x58] sm:$0xff]
    %v1127 = vld [vmem:[#allocation14 + $0x60] sm:$0xff]
    %v1128 = vld [vmem:[#allocation14 + $0x68] sm:$0xff]
    %v1129 = vld [vmem:[#allocation14 + $0x70] sm:$0xff]
    %v1130 = vld [vmem:[#allocation14 + $0x78] sm:$0xff]
    %v1131 = vlaneseq
    %v1132 = vshrl.u32 %v1131, 7
    %v1133 = vsub.s32 7, %v1132
    %v1134 = vrot.slane %v143, %v1133
    %1135 = vmatprep.subr.mxu0 0.0
    %1136 = vmatpush1.msra.mxu0 %v1130
    %1137 = vmatprep.subr.mxu0 0.0
    %1138 = vmatpush1.msra.mxu0 %v1129
    %1139 = vmatprep.subr.mxu0 0.0
    %1140 = vmatpush1.msra.mxu0 %v1128
    %1141 = vmatprep.subr.mxu0 0.0
    %1142 = vmatpush1.msra.mxu0 %v1127
    %1143 = vmatprep.subr.mxu0 0.0
    %1144 = vmatpush1.msra.mxu0 %v1126
    %1145 = vmatprep.subr.mxu0 0.0
    %1146 = vmatpush1.msra.mxu0 %v1125
    %1147 = vmatprep.subr.mxu0 0.0
    %1148 = vmatpush1.msra.mxu0 %v1124
    %1149 = vmatprep.subr.mxu0 0.0
    %1150 = vmatpush1.msra.mxu0 %v1123
    %1151 = vmatprep.subr.mxu0 0.0
    %1152 = vmatpush1.msra.mxu0 %v1122
    %1153 = vmatprep.subr.mxu0 0.0
    %1154 = vmatpush1.msra.mxu0 %v1121
    %1155 = vmatprep.subr.mxu0 0.0
    %1156 = vmatpush1.msra.mxu0 %v1120
    %1157 = vmatprep.subr.mxu0 0.0
    %1158 = vmatpush1.msra.mxu0 %v1119
    %1159 = vmatprep.subr.mxu0 0.0
    %1160 = vmatpush1.msra.mxu0 %v1118
    %1161 = vmatprep.subr.mxu0 0.0
    %1162 = vmatpush1.msra.mxu0 %v1117
    %1163 = vmatprep.subr.mxu0 0.0
    %1164 = vmatpush1.msra.mxu0 %v1116
    %1165 = vmatprep.subr.mxu0 0.0
    %1166 = vmatpush1.msra.mxu0 %v1115
    %1167 = vmatprep.subr.mxu0 0.0
    %1168 = vmatpush2.msra.mxu0 0.0
    %1169 = vmatprep.subr.mxu0 0.0
    %1170 = vmatpush2.msra.mxu0 0.0
    %1171 = vmatprep.subr.mxu0 0.0
    %1172 = vmatpush2.msra.mxu0 0.0
    %1173 = vmatprep.subr.mxu0 0.0
    %1174 = vmatpush2.msra.mxu0 0.0
    %1175 = vmatprep.subr.mxu0 0.0
    %1176 = vmatpush2.msra.mxu0 0.0
    %1177 = vmatprep.subr.mxu0 0.0
    %1178 = vmatpush2.msra.mxu0 0.0
    %1179 = vmatprep.subr.mxu0 0.0
    %1180 = vmatpush2.msra.mxu0 0.0
    %1181 = vmatprep.subr.mxu0 0.0
    %1182 = vmatpush2.msra.mxu0 0.0
    %1183 = vmatprep.subr.mxu0 0.0
    %1184 = vmatpush2.msra.mxu0 0.0
    %1185 = vmatprep.subr.mxu0 0.0
    %1186 = vmatpush2.msra.mxu0 0.0
    %1187 = vmatprep.subr.mxu0 0.0
    %1188 = vmatpush2.msra.mxu0 0.0
    %1189 = vmatprep.subr.mxu0 0.0
    %1190 = vmatpush2.msra.mxu0 0.0
    %1191 = vmatprep.subr.mxu0 0.0
    %1192 = vmatpush2.msra.mxu0 0.0
    %1193 = vmatprep.subr.mxu0 0.0
    %1194 = vmatpush2.msra.mxu0 0.0
    %1195 = vmatprep.subr.mxu0 0.0
    %1196 = vmatpush2.msra.mxu0 0.0
    %1197 = vmatprep.subr.mxu0 0.0
    %1198 = vmatpush2.msra.mxu0 0.0
    %1199 = vmatprep.mubr.f32.mxu0 0.0
    %1200 = vmatmul.mubr.f32.gmra.mxu0 %v1113
    %v1201 = vpop.f32.mrf.mxu0
    %v1202 = vadd.f32 %v1134, %v1201
    %v1203 = vpop.f32.mrf.mxu0
    %1204 = vmatprep.mubr.f32.mxu0 0.0
    %1205 = vmatmul.mubr.f32.gmra.mxu0 %v1114
    %v1206 = vpop.f32.mrf.mxu0
    %v1207 = vadd.f32 %v1134, %v1206
    %v1208 = vpop.f32.mrf.mxu0
    %1209 = vdwg.mxu0
    %v1210 = vmax.f32 %v1202, %v1207
    %v1211 = vrot.slane %v1210, 4
    %v1212 = vmax.f32 %v1210, %v1211
    %v1213 = vrot.slane %v1212, 2
    %v1214 = vmax.f32 %v1212, %v1213
    %v1215 = vrot.slane %v1214, 1
    %v1216 = vmax.f32 %v1214, %v1215
    %v1217 = vsub.f32 %v1202, %v1216
    %v1218 = vsub.f32 %v1207, %v1216
    %v1219 = vmul.f32 %v1217, 1.442695
    %v1220 = vpow.pop %v1219
    %v1221 = vmul.f32 %v1218, 1.442695
    %v1222 = vpow.pop %v1221
    %v1223 = vadd.f32 %v1220, %v1222
    %v1224 = vrot.slane %v1223, 4
    %v1225 = vadd.f32 %v1223, %v1224
    %v1226 = vrot.slane %v1225, 2
    %v1227 = vadd.f32 %v1225, %v1226
    %v1228 = vrot.slane %v1227, 1
    %v1229 = vadd.f32 %v1227, %v1228
    %v1230 = vmul.f32 %v629, %v1220
    %v1231 = vmul.f32 %v631, %v1222
    %v1232 = vadd.f32 %v1230, %v1231
    %v1233 = vrot.slane %v1232, 4
    %v1234 = vadd.f32 %v1232, %v1233
    %v1235 = vrot.slane %v1234, 2
    %v1236 = vadd.f32 %v1234, %v1235
    %v1237 = vrot.slane %v1236, 1
    %v1238 = vadd.f32 %v1236, %v1237
    %v1239 = vrcp.pop %v1229
    %v1240 = vmul.f32 %v1238, %v1239
    %1241 = vst [vmem:[#allocation16] sm:$0x1] %v1240
    // Predicated region
    $region74: #{tpu_custom_call.1} parent=1 // pred_check
      _
    $region75: #{tpu_custom_call.1} parent=1 // pred_check_branch
      %1243 = sbr.rel (0) target = $region77
    $region76: #{tpu_custom_call.1} parent=1 // pred_region
      %s1245 = ssub.s32 16, 16
      %1246 = vsyncadd [#allocation4], %s1245
      %s1248 = sshll.u32 [#allocation16], 4
      %s1249 = int_to_ptr.vmem [resolvable:$true] %s1248
      %1251 = dma.vmem_to_hbm [thread:$0]  %s1249, 16, %s10, [#allocation4]
    $region77: #{tpu_custom_call.1} parent=1 // pred_fallthru
      _
    // Predicated region
    $region78: #{tpu_custom_call.1} parent=1 // pred_check
      _
    $region79: #{tpu_custom_call.1} parent=1 // pred_check_branch
      %1253 = sbr.rel (0) target = $region81
    $region80: #{tpu_custom_call.1} parent=1 // pred_region
      %1254 = dma.done [#allocation4], 16
    $region81: #{tpu_custom_call.1} parent=1 // pred_fallthru
      _
    %1255 = vsyncpa [#allocation3], 1
    %1256 = vsyncpa [#allocation6], 1
    %1257 = vsyncpa [#allocation9], 1
    %1258 = vsyncpa [#allocation12], 1
    %1259 = vsyncpa [#allocation15], 1
    %1260 = vsyncpa [#allocation4], 1

</llo_original>
